<compile_context>
chip_gen: v7x
topology: tpu7x:2x2x1
jax: 0.10.0
libtpu: 0.0.40
codegen_flags: <defaults>
</compile_context>

<pallas_src>
import jax
import jax.numpy as jnp
import numpy as np
from jax import lax
from jax.experimental import pallas as pl
from jax.experimental.pallas import tpu as pltpu


# ----------------------------------------------------------------------------
# Kernel 1: GRU over the char sequence, single grid point, unrolled time loop.
# Returns only the final hidden state (PyTorch: _, out = nn.GRU(...)(x); gates r,z,n)
# ----------------------------------------------------------------------------
def char_gru_final_hidden(x_seq, w_ih, w_hh, b_ih, b_hh):
    """x_seq: (L, N, Ec) time-major (bf16). Returns (N, Hc) f32 final hidden."""
    L, N, Ec = x_seq.shape
    Hc = w_hh.shape[0]
    x2d = x_seq.reshape(L * N, Ec)  # wrapper-side reshape (plain JAX glue)

    def kernel(x_ref, wih_ref, whh_ref, bih_ref, bhh_ref, hout_ref):
        # Hoisted input projection: one batched MXU push, off the serial chain.
        gi = (jnp.dot(x_ref[...], wih_ref[...],
                      preferred_element_type=jnp.float32) + bih_ref[...])  # (L*N, 3Hc) f32
        w_hh_v = whh_ref[...]
        b_hh_v = bhh_ref[...]
        h = jnp.zeros((N, Hc), jnp.float32)
        # Fully unrolled recurrence: only h @ W_hh on the serial path.
        for t in range(L):
            gi_t = gi[t * N:(t + 1) * N, :]
            gh = (jnp.dot(h.astype(w_hh_v.dtype), w_hh_v,
                          preferred_element_type=jnp.float32) + b_hh_v)
            r = jax.nn.sigmoid(gi_t[:, 0 * Hc:1 * Hc] + gh[:, 0 * Hc:1 * Hc])
            z = jax.nn.sigmoid(gi_t[:, 1 * Hc:2 * Hc] + gh[:, 1 * Hc:2 * Hc])
            n = jnp.tanh(gi_t[:, 2 * Hc:3 * Hc] + r * gh[:, 2 * Hc:3 * Hc])
            h = (1.0 - z) * n + z * h
        hout_ref[...] = h.astype(hout_ref.dtype)

    return pl.pallas_call(
        kernel,
        out_shape=jax.ShapeDtypeStruct((N, Hc), jnp.float32),
        grid_spec=pltpu.PrefetchScalarGridSpec(
            num_scalar_prefetch=0,
            grid=(1,),
            in_specs=[
                pl.BlockSpec((L * N, Ec), lambda i: (0, 0)),
                pl.BlockSpec((Ec, 3 * Hc), lambda i: (0, 0)),
                pl.BlockSpec((Hc, 3 * Hc), lambda i: (0, 0)),
                pl.BlockSpec((1, 3 * Hc), lambda i: (0, 0)),
                pl.BlockSpec((1, 3 * Hc), lambda i: (0, 0)),
            ],
            out_specs=pl.BlockSpec((N, Hc), lambda i: (0, 0)),
        ),
        compiler_params=pltpu.CompilerParams(dimension_semantics=("arbitrary",)),
    )(x2d, w_ih, w_hh, b_ih, b_hh)


# ----------------------------------------------------------------------------
# Kernel 2: word-level LSTM (gates i,f,g,o), single grid point, unrolled time
# loop, with the classifier applied once to all hidden states at the end
# (lane-dense, 128-padded output).
# ----------------------------------------------------------------------------
def lstm_classifier(x_seq, w_ih, w_hh, b, w_cls, b_cls):
    """x_seq: (T, B, D) time-major (bf16); b = b_ih + b_hh pre-folded (f32).
    w_cls/b_cls already padded to a multiple of 128 classes.
    Returns (T*B, Cpad) f32 logits."""
    T, B, D = x_seq.shape
    H = w_hh.shape[0]
    Cp = w_cls.shape[1]
    x2d = x_seq.reshape(T * B, D)

    def kernel(x_ref, wih_ref, whh_ref, b_ref, wcls_ref, bcls_ref, out_ref, hs_ref):
        # Hoisted input projection with folded biases: one batched MXU push.
        gi = (jnp.dot(x_ref[...], wih_ref[...],
                      preferred_element_type=jnp.float32) + b_ref[...])  # (T*B, 4H) f32
        w_hh_v = whh_ref[...]
        h = jnp.zeros((B, H), jnp.float32)
        c = jnp.zeros((B, H), jnp.float32)
        for t in range(T):
            g = gi[t * B:(t + 1) * B, :] + jnp.dot(
                h.astype(w_hh_v.dtype), w_hh_v, preferred_element_type=jnp.float32)
            i = jax.nn.sigmoid(g[:, 0 * H:1 * H])
            f = jax.nn.sigmoid(g[:, 1 * H:2 * H])
            gg = jnp.tanh(g[:, 2 * H:3 * H])
            o = jax.nn.sigmoid(g[:, 3 * H:4 * H])
            c = f * c + i * gg
            h = o * jnp.tanh(c)
            hs_ref[t * B:(t + 1) * B, :] = h
        # Batched, lane-dense classifier (single matmul, single store).
        logits = (jnp.dot(hs_ref[...].astype(wcls_ref.dtype), wcls_ref[...],
                          preferred_element_type=jnp.float32) + bcls_ref[...])
        out_ref[...] = logits.astype(out_ref.dtype)

    return pl.pallas_call(
        kernel,
        out_shape=jax.ShapeDtypeStruct((T * B, Cp), jnp.float32),
        grid_spec=pltpu.PrefetchScalarGridSpec(
            num_scalar_prefetch=0,
            grid=(1,),
            in_specs=[
                pl.BlockSpec((T * B, D), lambda i: (0, 0)),
                pl.BlockSpec((D, 4 * H), lambda i: (0, 0)),
                pl.BlockSpec((H, 4 * H), lambda i: (0, 0)),
                pl.BlockSpec((1, 4 * H), lambda i: (0, 0)),
                pl.BlockSpec((H, Cp), lambda i: (0, 0)),
                pl.BlockSpec((1, Cp), lambda i: (0, 0)),
            ],
            out_specs=pl.BlockSpec((T * B, Cp), lambda i: (0, 0)),
            scratch_shapes=[pltpu.VMEM((T * B, H), jnp.float32)],
        ),
        compiler_params=pltpu.CompilerParams(dimension_semantics=("arbitrary",)),
    )(x2d, w_ih, w_hh, b, w_cls, b_cls)


# ----------------------------------------------------------------------------
# Full forward pass (glue in plain JAX: embedding gathers, reshapes/transposes,
# one-time bf16 weight casts, bias folding, classifier lane padding)
# ----------------------------------------------------------------------------
def pos_predictor_forward(params, x, char_seq):
    B, T = x.shape
    L = char_seq.shape[-1]

    # word embedding: (B, T) -> (B, T, E)
    word_e = jnp.take(params["word_emb"], x, axis=0)

    # char embedding: (T, B, L) -> (T, B, L, Ec) -> time-major (L, T*B, Ec)
    char_e = jnp.take(params["char_emb"], char_seq, axis=0)
    Ec = char_e.shape[-1]
    char_e_tm = jnp.transpose(char_e, (2, 0, 1, 3)).reshape(L, T * B, Ec)

    # per-word char GRU final hidden: (T*B, Hc) -> (B, T, Hc)
    h_char = char_gru_final_hidden(
        char_e_tm.astype(jnp.bfloat16),
        params["gru_w_ih"].astype(jnp.bfloat16),
        params["gru_w_hh"].astype(jnp.bfloat16),
        params["gru_b_ih"], params["gru_b_hh"])
    Hc = h_char.shape[-1]
    h_char = jnp.transpose(h_char.reshape(T, B, Hc), (1, 0, 2))

    # concat word emb + char features, go time-major for the LSTM kernel
    feats = jnp.concatenate([word_e, h_char], axis=-1)           # (B, T, E+Hc)
    feats_tm = jnp.transpose(feats, (1, 0, 2))                   # (T, B, E+Hc)

    # pre-fold LSTM biases, pad classifier to a 128-lane-dense output slab
    lstm_b = params["lstm_b_ih"] + params["lstm_b_hh"]
    C = params["cls_w"].shape[1]
    Cp = ((C + 127) // 128) * 128
    cls_w = jnp.pad(params["cls_w"], ((0, 0), (0, Cp - C)))
    cls_b = jnp.pad(params["cls_b"], ((0, 0), (0, Cp - C)))

    logits2d = lstm_classifier(
        feats_tm.astype(jnp.bfloat16),
        params["lstm_w_ih"].astype(jnp.bfloat16),
        params["lstm_w_hh"].astype(jnp.bfloat16),
        lstm_b,
        cls_w.astype(jnp.bfloat16), cls_b)                       # (T*B, Cp)

    logits = logits2d.reshape(T, B, Cp)[:, :, :C]                # (T, B, C)
    return jnp.transpose(logits, (1, 0, 2))                      # (B, T, C)


# ----------------------------------------------------------------------------
# Pure-JAX f32 reference (same math) for a correctness sanity check
# ----------------------------------------------------------------------------
def _ref_forward(params, x, char_seq):
    hp = lax.Precision.HIGHEST
    B, T = x.shape
    L = char_seq.shape[-1]
    word_e = jnp.take(params["word_emb"], x, axis=0)
    char_e = jnp.take(params["char_emb"], char_seq, axis=0)
    Ec = char_e.shape[-1]
    xs = jnp.transpose(char_e, (2, 0, 1, 3)).reshape(L, T * B, Ec)

    Hc = params["gru_w_hh"].shape[0]

    def gru_step(h, xt):
        gi = jnp.dot(xt, params["gru_w_ih"], precision=hp) + params["gru_b_ih"]
        gh = jnp.dot(h, params["gru_w_hh"], precision=hp) + params["gru_b_hh"]
        r = jax.nn.sigmoid(gi[:, :Hc] + gh[:, :Hc])
        z = jax.nn.sigmoid(gi[:, Hc:2 * Hc] + gh[:, Hc:2 * Hc])
        n = jnp.tanh(gi[:, 2 * Hc:] + r * gh[:, 2 * Hc:])
        return (1.0 - z) * n + z * h, None

    h0 = jnp.zeros((T * B, Hc), jnp.float32)
    h_char, _ = lax.scan(gru_step, h0, xs)
    h_char = jnp.transpose(h_char.reshape(T, B, Hc), (1, 0, 2))

    feats = jnp.transpose(jnp.concatenate([word_e, h_char], axis=-1), (1, 0, 2))
    H = params["lstm_w_hh"].shape[0]

    def lstm_step(carry, xt):
        h, c = carry
        g = (jnp.dot(xt, params["lstm_w_ih"], precision=hp) + params["lstm_b_ih"]
             + jnp.dot(h, params["lstm_w_hh"], precision=hp) + params["lstm_b_hh"])
        i = jax.nn.sigmoid(g[:, :H]); f = jax.nn.sigmoid(g[:, H:2 * H])
        gg = jnp.tanh(g[:, 2 * H:3 * H]); o = jax.nn.sigmoid(g[:, 3 * H:])
        c_new = f * c + i * gg
        h_new = o * jnp.tanh(c_new)
        return (h_new, c_new), h_new

    (_, _), hs = lax.scan(lstm_step,
                          (jnp.zeros((B, H), jnp.float32), jnp.zeros((B, H), jnp.float32)),
                          feats)
    logits = jnp.dot(hs, params["cls_w"], precision=hp) + params["cls_b"]
    return jnp.transpose(logits, (1, 0, 2))


# ----------------------------------------------------------------------------
def make_params(key, vocab_size, emb_dim, hidden_dim, n_classes,
                n_chars, char_emb_dim, char_hidden_dim):
    ks = jax.random.split(key, 12)
    s = 0.1
    d_in = emb_dim + char_emb_dim   # LSTM input size (module assumes char_emb_dim == char_hidden_dim)
    return {
        "word_emb": s * jax.random.normal(ks[0], (vocab_size, emb_dim), jnp.float32),
        "char_emb": s * jax.random.normal(ks[1], (n_chars, char_emb_dim), jnp.float32),
        # GRU (gate order r, z, n), stored transposed for x @ W
        "gru_w_ih": s * jax.random.normal(ks[2], (char_emb_dim, 3 * char_hidden_dim), jnp.float32),
        "gru_w_hh": s * jax.random.normal(ks[3], (char_hidden_dim, 3 * char_hidden_dim), jnp.float32),
        "gru_b_ih": s * jax.random.normal(ks[4], (1, 3 * char_hidden_dim), jnp.float32),
        "gru_b_hh": s * jax.random.normal(ks[5], (1, 3 * char_hidden_dim), jnp.float32),
        # LSTM (gate order i, f, g, o), stored transposed
        "lstm_w_ih": s * jax.random.normal(ks[6], (d_in, 4 * hidden_dim), jnp.float32),
        "lstm_w_hh": s * jax.random.normal(ks[7], (hidden_dim, 4 * hidden_dim), jnp.float32),
        "lstm_b_ih": s * jax.random.normal(ks[8], (1, 4 * hidden_dim), jnp.float32),
        "lstm_b_hh": s * jax.random.normal(ks[9], (1, 4 * hidden_dim), jnp.float32),
        # classifier
        "cls_w": s * jax.random.normal(ks[10], (hidden_dim, n_classes), jnp.float32),
        "cls_b": s * jax.random.normal(ks[11], (1, n_classes), jnp.float32),
    }


if __name__ == "__main__":
    B, T, L = 2, 8, 6
    vocab_size, emb_dim, hidden_dim, n_classes = 30, 16, 32, 10
    n_chars, char_emb_dim, char_hidden_dim = 20, 16, 16  # char_emb_dim == char_hidden_dim (module requirement)

    key = jax.random.PRNGKey(0)
    kp, kx, kc = jax.random.split(key, 3)
    params = make_params(kp, vocab_size, emb_dim, hidden_dim, n_classes,
                         n_chars, char_emb_dim, char_hidden_dim)

    x = jax.random.randint(kx, (B, T), 0, vocab_size, dtype=jnp.int32)
    # TODO(synk): PyTorch runs variable-length per-word char sequences; here a fixed-length
    # char window per word is used (padding chars flow through the GRU).
    char_seq = jax.random.randint(kc, (T, B, L), 0, n_chars, dtype=jnp.int32)

    out = jax.jit(pos_predictor_forward)(params, x, char_seq)
    out = jax.block_until_ready(out)

    ref = jax.block_until_ready(_ref_forward(params, x, char_seq))
    assert out.shape == (B, T, n_classes)
    np.testing.assert_allclose(np.asarray(out), np.asarray(ref), rtol=2e-2, atol=2e-2)

    print("KERNEL_OK")
</pallas_src>

<mosaic_0001>
module attributes {stable_mosaic.version = 11 : i64} {
  func.func @kernel(%arg0: i32, %arg1: memref<96x16xbf16, #tpu.memory_space<vmem>>, %arg2: memref<16x48xbf16, #tpu.memory_space<vmem>>, %arg3: memref<16x48xbf16, #tpu.memory_space<vmem>>, %arg4: memref<1x48xf32, #tpu.memory_space<vmem>>, %arg5: memref<1x48xf32, #tpu.memory_space<vmem>>, %arg6: memref<16x16xf32, #tpu.memory_space<vmem>>) attributes {dimension_semantics = [#tpu.dimension_semantics<arbitrary>], iteration_bounds = array<i64: 1>, scalar_prefetch = 0 : i64, scratch_operands = 0 : i64, tpu.core_type = #tpu.core_type<tc>, window_params = [{pipeline_mode = #tpu.pipeline_mode<synchronous>, transform_indices = @transform_0, window_bounds = array<i64: 96, 16>}, {pipeline_mode = #tpu.pipeline_mode<synchronous>, transform_indices = @transform_1, window_bounds = array<i64: 16, 48>}, {pipeline_mode = #tpu.pipeline_mode<synchronous>, transform_indices = @transform_2, window_bounds = array<i64: 16, 48>}, {pipeline_mode = #tpu.pipeline_mode<synchronous>, transform_indices = @transform_3, window_bounds = array<i64: 1, 48>}, {pipeline_mode = #tpu.pipeline_mode<synchronous>, transform_indices = @transform_4, window_bounds = array<i64: 1, 48>}, {pipeline_mode = #tpu.pipeline_mode<synchronous>, transform_indices = @transform_5, window_bounds = array<i64: 16, 16>}]} {
    %c0 = arith.constant 0 : index
    %c0_0 = arith.constant 0 : index
    %0 = vector.load %arg1[%c0, %c0_0] : memref<96x16xbf16, #tpu.memory_space<vmem>>, vector<96x16xbf16>
    %c0_1 = arith.constant 0 : index
    %c0_2 = arith.constant 0 : index
    %1 = vector.load %arg2[%c0_1, %c0_2] : memref<16x48xbf16, #tpu.memory_space<vmem>>, vector<16x48xbf16>
    %cst = arith.constant dense<0.000000e+00> : vector<96x48xf32>
    %2 = tpu.matmul %0, %1, %cst {dimension_numbers = #tpu.dot_dimension_numbers<[1], [0], [0], [1], [0, 0, 1, 1], [], []>} : vector<96x16xbf16>, vector<16x48xbf16>, vector<96x48xf32> -> vector<96x48xf32>
    %c0_3 = arith.constant 0 : index
    %c0_4 = arith.constant 0 : index
    %3 = vector.load %arg4[%c0_3, %c0_4] : memref<1x48xf32, #tpu.memory_space<vmem>>, vector<1x48xf32>
    %4 = vector.broadcast %3 : vector<1x48xf32> to vector<96x48xf32>
    %5 = arith.addf %2, %4 : vector<96x48xf32>
    %c0_5 = arith.constant 0 : index
    %c0_6 = arith.constant 0 : index
    %6 = vector.load %arg3[%c0_5, %c0_6] : memref<16x48xbf16, #tpu.memory_space<vmem>>, vector<16x48xbf16>
    %c0_7 = arith.constant 0 : index
    %c0_8 = arith.constant 0 : index
    %7 = vector.load %arg5[%c0_7, %c0_8] : memref<1x48xf32, #tpu.memory_space<vmem>>, vector<1x48xf32>
    %cst_9 = arith.constant 0.000000e+00 : f32
    %8 = vector.broadcast %cst_9 : f32 to vector<16x16xf32>
    %9 = vector.extract_strided_slice %5 {offsets = [0, 0], sizes = [16, 48], strides = [1, 1]} : vector<96x48xf32> to vector<16x48xf32>
    %10 = arith.truncf %8 : vector<16x16xf32> to vector<16x16xbf16>
    %cst_10 = arith.constant dense<0.000000e+00> : vector<16x48xf32>
    %11 = tpu.matmul %10, %6, %cst_10 {dimension_numbers = #tpu.dot_dimension_numbers<[1], [0], [0], [1], [0, 0, 1, 1], [], []>} : vector<16x16xbf16>, vector<16x48xbf16>, vector<16x48xf32> -> vector<16x48xf32>
    %12 = vector.broadcast %7 : vector<1x48xf32> to vector<16x48xf32>
    %13 = arith.addf %11, %12 : vector<16x48xf32>
    %14 = vector.extract_strided_slice %9 {offsets = [0, 0], sizes = [16, 16], strides = [1, 1]} : vector<16x48xf32> to vector<16x16xf32>
    %15 = vector.extract_strided_slice %13 {offsets = [0, 0], sizes = [16, 16], strides = [1, 1]} : vector<16x48xf32> to vector<16x16xf32>
    %16 = arith.addf %14, %15 : vector<16x16xf32>
    %17 = arith.negf %16 : vector<16x16xf32>
    %18 = math.exp %17 : vector<16x16xf32>
    %cst_11 = arith.constant 1.000000e+00 : f32
    %19 = vector.broadcast %cst_11 : f32 to vector<16x16xf32>
    %20 = arith.addf %19, %18 : vector<16x16xf32>
    %21 = arith.divf %19, %20 : vector<16x16xf32>
    %22 = vector.extract_strided_slice %9 {offsets = [0, 16], sizes = [16, 16], strides = [1, 1]} : vector<16x48xf32> to vector<16x16xf32>
    %23 = vector.extract_strided_slice %13 {offsets = [0, 16], sizes = [16, 16], strides = [1, 1]} : vector<16x48xf32> to vector<16x16xf32>
    %24 = arith.addf %22, %23 : vector<16x16xf32>
    %25 = arith.negf %24 : vector<16x16xf32>
    %26 = math.exp %25 : vector<16x16xf32>
    %cst_12 = arith.constant 1.000000e+00 : f32
    %27 = vector.broadcast %cst_12 : f32 to vector<16x16xf32>
    %28 = arith.addf %27, %26 : vector<16x16xf32>
    %29 = arith.divf %27, %28 : vector<16x16xf32>
    %30 = vector.extract_strided_slice %9 {offsets = [0, 32], sizes = [16, 16], strides = [1, 1]} : vector<16x48xf32> to vector<16x16xf32>
    %31 = vector.extract_strided_slice %13 {offsets = [0, 32], sizes = [16, 16], strides = [1, 1]} : vector<16x48xf32> to vector<16x16xf32>
    %32 = arith.mulf %21, %31 : vector<16x16xf32>
    %33 = arith.addf %30, %32 : vector<16x16xf32>
    %34 = math.tanh %33 : vector<16x16xf32>
    %cst_13 = arith.constant 1.000000e+00 : f32
    %35 = vector.broadcast %cst_13 : f32 to vector<16x16xf32>
    %36 = arith.subf %35, %29 : vector<16x16xf32>
    %37 = arith.mulf %36, %34 : vector<16x16xf32>
    %38 = arith.mulf %29, %8 : vector<16x16xf32>
    %39 = arith.addf %37, %38 : vector<16x16xf32>
    %40 = vector.extract_strided_slice %5 {offsets = [16, 0], sizes = [16, 48], strides = [1, 1]} : vector<96x48xf32> to vector<16x48xf32>
    %41 = arith.truncf %39 : vector<16x16xf32> to vector<16x16xbf16>
    %cst_14 = arith.constant dense<0.000000e+00> : vector<16x48xf32>
    %42 = tpu.matmul %41, %6, %cst_14 {dimension_numbers = #tpu.dot_dimension_numbers<[1], [0], [0], [1], [0, 0, 1, 1], [], []>} : vector<16x16xbf16>, vector<16x48xbf16>, vector<16x48xf32> -> vector<16x48xf32>
    %43 = vector.broadcast %7 : vector<1x48xf32> to vector<16x48xf32>
    %44 = arith.addf %42, %43 : vector<16x48xf32>
    %45 = vector.extract_strided_slice %40 {offsets = [0, 0], sizes = [16, 16], strides = [1, 1]} : vector<16x48xf32> to vector<16x16xf32>
    %46 = vector.extract_strided_slice %44 {offsets = [0, 0], sizes = [16, 16], strides = [1, 1]} : vector<16x48xf32> to vector<16x16xf32>
    %47 = arith.addf %45, %46 : vector<16x16xf32>
    %48 = arith.negf %47 : vector<16x16xf32>
    %49 = math.exp %48 : vector<16x16xf32>
    %cst_15 = arith.constant 1.000000e+00 : f32
    %50 = vector.broadcast %cst_15 : f32 to vector<16x16xf32>
    %51 = arith.addf %50, %49 : vector<16x16xf32>
    %52 = arith.divf %50, %51 : vector<16x16xf32>
    %53 = vector.extract_strided_slice %40 {offsets = [0, 16], sizes = [16, 16], strides = [1, 1]} : vector<16x48xf32> to vector<16x16xf32>
    %54 = vector.extract_strided_slice %44 {offsets = [0, 16], sizes = [16, 16], strides = [1, 1]} : vector<16x48xf32> to vector<16x16xf32>
    %55 = arith.addf %53, %54 : vector<16x16xf32>
    %56 = arith.negf %55 : vector<16x16xf32>
    %57 = math.exp %56 : vector<16x16xf32>
    %cst_16 = arith.constant 1.000000e+00 : f32
    %58 = vector.broadcast %cst_16 : f32 to vector<16x16xf32>
    %59 = arith.addf %58, %57 : vector<16x16xf32>
    %60 = arith.divf %58, %59 : vector<16x16xf32>
    %61 = vector.extract_strided_slice %40 {offsets = [0, 32], sizes = [16, 16], strides = [1, 1]} : vector<16x48xf32> to vector<16x16xf32>
    %62 = vector.extract_strided_slice %44 {offsets = [0, 32], sizes = [16, 16], strides = [1, 1]} : vector<16x48xf32> to vector<16x16xf32>
    %63 = arith.mulf %52, %62 : vector<16x16xf32>
    %64 = arith.addf %61, %63 : vector<16x16xf32>
    %65 = math.tanh %64 : vector<16x16xf32>
    %cst_17 = arith.constant 1.000000e+00 : f32
    %66 = vector.broadcast %cst_17 : f32 to vector<16x16xf32>
    %67 = arith.subf %66, %60 : vector<16x16xf32>
    %68 = arith.mulf %67, %65 : vector<16x16xf32>
    %69 = arith.mulf %60, %39 : vector<16x16xf32>
    %70 = arith.addf %68, %69 : vector<16x16xf32>
    %71 = vector.extract_strided_slice %5 {offsets = [32, 0], sizes = [16, 48], strides = [1, 1]} : vector<96x48xf32> to vector<16x48xf32>
    %72 = arith.truncf %70 : vector<16x16xf32> to vector<16x16xbf16>
    %cst_18 = arith.constant dense<0.000000e+00> : vector<16x48xf32>
    %73 = tpu.matmul %72, %6, %cst_18 {dimension_numbers = #tpu.dot_dimension_numbers<[1], [0], [0], [1], [0, 0, 1, 1], [], []>} : vector<16x16xbf16>, vector<16x48xbf16>, vector<16x48xf32> -> vector<16x48xf32>
    %74 = vector.broadcast %7 : vector<1x48xf32> to vector<16x48xf32>
    %75 = arith.addf %73, %74 : vector<16x48xf32>
    %76 = vector.extract_strided_slice %71 {offsets = [0, 0], sizes = [16, 16], strides = [1, 1]} : vector<16x48xf32> to vector<16x16xf32>
    %77 = vector.extract_strided_slice %75 {offsets = [0, 0], sizes = [16, 16], strides = [1, 1]} : vector<16x48xf32> to vector<16x16xf32>
    %78 = arith.addf %76, %77 : vector<16x16xf32>
    %79 = arith.negf %78 : vector<16x16xf32>
    %80 = math.exp %79 : vector<16x16xf32>
    %cst_19 = arith.constant 1.000000e+00 : f32
    %81 = vector.broadcast %cst_19 : f32 to vector<16x16xf32>
    %82 = arith.addf %81, %80 : vector<16x16xf32>
    %83 = arith.divf %81, %82 : vector<16x16xf32>
    %84 = vector.extract_strided_slice %71 {offsets = [0, 16], sizes = [16, 16], strides = [1, 1]} : vector<16x48xf32> to vector<16x16xf32>
    %85 = vector.extract_strided_slice %75 {offsets = [0, 16], sizes = [16, 16], strides = [1, 1]} : vector<16x48xf32> to vector<16x16xf32>
    %86 = arith.addf %84, %85 : vector<16x16xf32>
    %87 = arith.negf %86 : vector<16x16xf32>
    %88 = math.exp %87 : vector<16x16xf32>
    %cst_20 = arith.constant 1.000000e+00 : f32
    %89 = vector.broadcast %cst_20 : f32 to vector<16x16xf32>
    %90 = arith.addf %89, %88 : vector<16x16xf32>
    %91 = arith.divf %89, %90 : vector<16x16xf32>
    %92 = vector.extract_strided_slice %71 {offsets = [0, 32], sizes = [16, 16], strides = [1, 1]} : vector<16x48xf32> to vector<16x16xf32>
    %93 = vector.extract_strided_slice %75 {offsets = [0, 32], sizes = [16, 16], strides = [1, 1]} : vector<16x48xf32> to vector<16x16xf32>
    %94 = arith.mulf %83, %93 : vector<16x16xf32>
    %95 = arith.addf %92, %94 : vector<16x16xf32>
    %96 = math.tanh %95 : vector<16x16xf32>
    %cst_21 = arith.constant 1.000000e+00 : f32
    %97 = vector.broadcast %cst_21 : f32 to vector<16x16xf32>
    %98 = arith.subf %97, %91 : vector<16x16xf32>
    %99 = arith.mulf %98, %96 : vector<16x16xf32>
    %100 = arith.mulf %91, %70 : vector<16x16xf32>
    %101 = arith.addf %99, %100 : vector<16x16xf32>
    %102 = vector.extract_strided_slice %5 {offsets = [48, 0], sizes = [16, 48], strides = [1, 1]} : vector<96x48xf32> to vector<16x48xf32>
    %103 = arith.truncf %101 : vector<16x16xf32> to vector<16x16xbf16>
    %cst_22 = arith.constant dense<0.000000e+00> : vector<16x48xf32>
    %104 = tpu.matmul %103, %6, %cst_22 {dimension_numbers = #tpu.dot_dimension_numbers<[1], [0], [0], [1], [0, 0, 1, 1], [], []>} : vector<16x16xbf16>, vector<16x48xbf16>, vector<16x48xf32> -> vector<16x48xf32>
    %105 = vector.broadcast %7 : vector<1x48xf32> to vector<16x48xf32>
    %106 = arith.addf %104, %105 : vector<16x48xf32>
    %107 = vector.extract_strided_slice %102 {offsets = [0, 0], sizes = [16, 16], strides = [1, 1]} : vector<16x48xf32> to vector<16x16xf32>
    %108 = vector.extract_strided_slice %106 {offsets = [0, 0], sizes = [16, 16], strides = [1, 1]} : vector<16x48xf32> to vector<16x16xf32>
    %109 = arith.addf %107, %108 : vector<16x16xf32>
    %110 = arith.negf %109 : vector<16x16xf32>
    %111 = math.exp %110 : vector<16x16xf32>
    %cst_23 = arith.constant 1.000000e+00 : f32
    %112 = vector.broadcast %cst_23 : f32 to vector<16x16xf32>
    %113 = arith.addf %112, %111 : vector<16x16xf32>
    %114 = arith.divf %112, %113 : vector<16x16xf32>
    %115 = vector.extract_strided_slice %102 {offsets = [0, 16], sizes = [16, 16], strides = [1, 1]} : vector<16x48xf32> to vector<16x16xf32>
    %116 = vector.extract_strided_slice %106 {offsets = [0, 16], sizes = [16, 16], strides = [1, 1]} : vector<16x48xf32> to vector<16x16xf32>
    %117 = arith.addf %115, %116 : vector<16x16xf32>
    %118 = arith.negf %117 : vector<16x16xf32>
    %119 = math.exp %118 : vector<16x16xf32>
    %cst_24 = arith.constant 1.000000e+00 : f32
    %120 = vector.broadcast %cst_24 : f32 to vector<16x16xf32>
    %121 = arith.addf %120, %119 : vector<16x16xf32>
    %122 = arith.divf %120, %121 : vector<16x16xf32>
    %123 = vector.extract_strided_slice %102 {offsets = [0, 32], sizes = [16, 16], strides = [1, 1]} : vector<16x48xf32> to vector<16x16xf32>
    %124 = vector.extract_strided_slice %106 {offsets = [0, 32], sizes = [16, 16], strides = [1, 1]} : vector<16x48xf32> to vector<16x16xf32>
    %125 = arith.mulf %114, %124 : vector<16x16xf32>
    %126 = arith.addf %123, %125 : vector<16x16xf32>
    %127 = math.tanh %126 : vector<16x16xf32>
    %cst_25 = arith.constant 1.000000e+00 : f32
    %128 = vector.broadcast %cst_25 : f32 to vector<16x16xf32>
    %129 = arith.subf %128, %122 : vector<16x16xf32>
    %130 = arith.mulf %129, %127 : vector<16x16xf32>
    %131 = arith.mulf %122, %101 : vector<16x16xf32>
    %132 = arith.addf %130, %131 : vector<16x16xf32>
    %133 = vector.extract_strided_slice %5 {offsets = [64, 0], sizes = [16, 48], strides = [1, 1]} : vector<96x48xf32> to vector<16x48xf32>
    %134 = arith.truncf %132 : vector<16x16xf32> to vector<16x16xbf16>
    %cst_26 = arith.constant dense<0.000000e+00> : vector<16x48xf32>
    %135 = tpu.matmul %134, %6, %cst_26 {dimension_numbers = #tpu.dot_dimension_numbers<[1], [0], [0], [1], [0, 0, 1, 1], [], []>} : vector<16x16xbf16>, vector<16x48xbf16>, vector<16x48xf32> -> vector<16x48xf32>
    %136 = vector.broadcast %7 : vector<1x48xf32> to vector<16x48xf32>
    %137 = arith.addf %135, %136 : vector<16x48xf32>
    %138 = vector.extract_strided_slice %133 {offsets = [0, 0], sizes = [16, 16], strides = [1, 1]} : vector<16x48xf32> to vector<16x16xf32>
    %139 = vector.extract_strided_slice %137 {offsets = [0, 0], sizes = [16, 16], strides = [1, 1]} : vector<16x48xf32> to vector<16x16xf32>
    %140 = arith.addf %138, %139 : vector<16x16xf32>
    %141 = arith.negf %140 : vector<16x16xf32>
    %142 = math.exp %141 : vector<16x16xf32>
    %cst_27 = arith.constant 1.000000e+00 : f32
    %143 = vector.broadcast %cst_27 : f32 to vector<16x16xf32>
    %144 = arith.addf %143, %142 : vector<16x16xf32>
    %145 = arith.divf %143, %144 : vector<16x16xf32>
    %146 = vector.extract_strided_slice %133 {offsets = [0, 16], sizes = [16, 16], strides = [1, 1]} : vector<16x48xf32> to vector<16x16xf32>
    %147 = vector.extract_strided_slice %137 {offsets = [0, 16], sizes = [16, 16], strides = [1, 1]} : vector<16x48xf32> to vector<16x16xf32>
    %148 = arith.addf %146, %147 : vector<16x16xf32>
    %149 = arith.negf %148 : vector<16x16xf32>
    %150 = math.exp %149 : vector<16x16xf32>
    %cst_28 = arith.constant 1.000000e+00 : f32
    %151 = vector.broadcast %cst_28 : f32 to vector<16x16xf32>
    %152 = arith.addf %151, %150 : vector<16x16xf32>
    %153 = arith.divf %151, %152 : vector<16x16xf32>
    %154 = vector.extract_strided_slice %133 {offsets = [0, 32], sizes = [16, 16], strides = [1, 1]} : vector<16x48xf32> to vector<16x16xf32>
    %155 = vector.extract_strided_slice %137 {offsets = [0, 32], sizes = [16, 16], strides = [1, 1]} : vector<16x48xf32> to vector<16x16xf32>
    %156 = arith.mulf %145, %155 : vector<16x16xf32>
    %157 = arith.addf %154, %156 : vector<16x16xf32>
    %158 = math.tanh %157 : vector<16x16xf32>
    %cst_29 = arith.constant 1.000000e+00 : f32
    %159 = vector.broadcast %cst_29 : f32 to vector<16x16xf32>
    %160 = arith.subf %159, %153 : vector<16x16xf32>
    %161 = arith.mulf %160, %158 : vector<16x16xf32>
    %162 = arith.mulf %153, %132 : vector<16x16xf32>
    %163 = arith.addf %161, %162 : vector<16x16xf32>
    %164 = vector.extract_strided_slice %5 {offsets = [80, 0], sizes = [16, 48], strides = [1, 1]} : vector<96x48xf32> to vector<16x48xf32>
    %165 = arith.truncf %163 : vector<16x16xf32> to vector<16x16xbf16>
    %cst_30 = arith.constant dense<0.000000e+00> : vector<16x48xf32>
    %166 = tpu.matmul %165, %6, %cst_30 {dimension_numbers = #tpu.dot_dimension_numbers<[1], [0], [0], [1], [0, 0, 1, 1], [], []>} : vector<16x16xbf16>, vector<16x48xbf16>, vector<16x48xf32> -> vector<16x48xf32>
    %167 = vector.broadcast %7 : vector<1x48xf32> to vector<16x48xf32>
    %168 = arith.addf %166, %167 : vector<16x48xf32>
    %169 = vector.extract_strided_slice %164 {offsets = [0, 0], sizes = [16, 16], strides = [1, 1]} : vector<16x48xf32> to vector<16x16xf32>
    %170 = vector.extract_strided_slice %168 {offsets = [0, 0], sizes = [16, 16], strides = [1, 1]} : vector<16x48xf32> to vector<16x16xf32>
    %171 = arith.addf %169, %170 : vector<16x16xf32>
    %172 = arith.negf %171 : vector<16x16xf32>
    %173 = math.exp %172 : vector<16x16xf32>
    %cst_31 = arith.constant 1.000000e+00 : f32
    %174 = vector.broadcast %cst_31 : f32 to vector<16x16xf32>
    %175 = arith.addf %174, %173 : vector<16x16xf32>
    %176 = arith.divf %174, %175 : vector<16x16xf32>
    %177 = vector.extract_strided_slice %164 {offsets = [0, 16], sizes = [16, 16], strides = [1, 1]} : vector<16x48xf32> to vector<16x16xf32>
    %178 = vector.extract_strided_slice %168 {offsets = [0, 16], sizes = [16, 16], strides = [1, 1]} : vector<16x48xf32> to vector<16x16xf32>
    %179 = arith.addf %177, %178 : vector<16x16xf32>
    %180 = arith.negf %179 : vector<16x16xf32>
    %181 = math.exp %180 : vector<16x16xf32>
    %cst_32 = arith.constant 1.000000e+00 : f32
    %182 = vector.broadcast %cst_32 : f32 to vector<16x16xf32>
    %183 = arith.addf %182, %181 : vector<16x16xf32>
    %184 = arith.divf %182, %183 : vector<16x16xf32>
    %185 = vector.extract_strided_slice %164 {offsets = [0, 32], sizes = [16, 16], strides = [1, 1]} : vector<16x48xf32> to vector<16x16xf32>
    %186 = vector.extract_strided_slice %168 {offsets = [0, 32], sizes = [16, 16], strides = [1, 1]} : vector<16x48xf32> to vector<16x16xf32>
    %187 = arith.mulf %176, %186 : vector<16x16xf32>
    %188 = arith.addf %185, %187 : vector<16x16xf32>
    %189 = math.tanh %188 : vector<16x16xf32>
    %cst_33 = arith.constant 1.000000e+00 : f32
    %190 = vector.broadcast %cst_33 : f32 to vector<16x16xf32>
    %191 = arith.subf %190, %184 : vector<16x16xf32>
    %192 = arith.mulf %191, %189 : vector<16x16xf32>
    %193 = arith.mulf %184, %163 : vector<16x16xf32>
    %194 = arith.addf %192, %193 : vector<16x16xf32>
    %c0_34 = arith.constant 0 : index
    %c0_35 = arith.constant 0 : index
    %195 = vector.load %arg6[%c0_34, %c0_35] : memref<16x16xf32, #tpu.memory_space<vmem>>, vector<16x16xf32>
    tpu.vector_store %arg6[%c0_34, %c0_35], %194 {strides = array<i32>} : memref<16x16xf32, #tpu.memory_space<vmem>>, vector<16x16xf32>,
    return
  }
  func.func @transform_0(%arg0: i32) -> (i32, i32) {
    %c0_i32 = arith.constant 0 : i32
    %c0_i32_0 = arith.constant 0 : i32
    %c0_i32_1 = arith.constant 0 : i32
    return %c0_i32, %c0_i32_0 : i32, i32
  }
  func.func @transform_1(%arg0: i32) -> (i32, i32) {
    %c0_i32 = arith.constant 0 : i32
    %c0_i32_0 = arith.constant 0 : i32
    %c0_i32_1 = arith.constant 0 : i32
    return %c0_i32, %c0_i32_0 : i32, i32
  }
  func.func @transform_2(%arg0: i32) -> (i32, i32) {
    %c0_i32 = arith.constant 0 : i32
    %c0_i32_0 = arith.constant 0 : i32
    %c0_i32_1 = arith.constant 0 : i32
    return %c0_i32, %c0_i32_0 : i32, i32
  }
  func.func @transform_3(%arg0: i32) -> (i32, i32) {
    %c0_i32 = arith.constant 0 : i32
    %c0_i32_0 = arith.constant 0 : i32
    %c0_i32_1 = arith.constant 0 : i32
    return %c0_i32, %c0_i32_0 : i32, i32
  }
  func.func @transform_4(%arg0: i32) -> (i32, i32) {
    %c0_i32 = arith.constant 0 : i32
    %c0_i32_0 = arith.constant 0 : i32
    %c0_i32_1 = arith.constant 0 : i32
    return %c0_i32, %c0_i32_0 : i32, i32
  }
  func.func @transform_5(%arg0: i32) -> (i32, i32) {
    %c0_i32 = arith.constant 0 : i32
    %c0_i32_0 = arith.constant 0 : i32
    %c0_i32_1 = arith.constant 0 : i32
    return %c0_i32, %c0_i32_0 : i32, i32
  }
}

module attributes {stable_mosaic.version = 11 : i64} {
  func.func @kernel(%arg0: i32, %arg1: memref<16x32xbf16, #tpu.memory_space<vmem>>, %arg2: memref<32x128xbf16, #tpu.memory_space<vmem>>, %arg3: memref<32x128xbf16, #tpu.memory_space<vmem>>, %arg4: memref<1x128xf32, #tpu.memory_space<vmem>>, %arg5: memref<32x128xbf16, #tpu.memory_space<vmem>>, %arg6: memref<1x128xf32, #tpu.memory_space<vmem>>, %arg7: memref<16x128xf32, #tpu.memory_space<vmem>>, %arg8: memref<16x32xf32, #tpu.memory_space<vmem>>) attributes {dimension_semantics = [#tpu.dimension_semantics<arbitrary>], iteration_bounds = array<i64: 1>, scalar_prefetch = 0 : i64, scratch_operands = 1 : i64, tpu.core_type = #tpu.core_type<tc>, window_params = [{pipeline_mode = #tpu.pipeline_mode<synchronous>, transform_indices = @transform_0, window_bounds = array<i64: 16, 32>}, {pipeline_mode = #tpu.pipeline_mode<synchronous>, transform_indices = @transform_1, window_bounds = array<i64: 32, 128>}, {pipeline_mode = #tpu.pipeline_mode<synchronous>, transform_indices = @transform_2, window_bounds = array<i64: 32, 128>}, {pipeline_mode = #tpu.pipeline_mode<synchronous>, transform_indices = @transform_3, window_bounds = array<i64: 1, 128>}, {pipeline_mode = #tpu.pipeline_mode<synchronous>, transform_indices = @transform_4, window_bounds = array<i64: 32, 128>}, {pipeline_mode = #tpu.pipeline_mode<synchronous>, transform_indices = @transform_5, window_bounds = array<i64: 1, 128>}, {pipeline_mode = #tpu.pipeline_mode<synchronous>, transform_indices = @transform_6, window_bounds = array<i64: 16, 128>}]} {
    %c0 = arith.constant 0 : index
    %c0_0 = arith.constant 0 : index
    %0 = vector.load %arg1[%c0, %c0_0] : memref<16x32xbf16, #tpu.memory_space<vmem>>, vector<16x32xbf16>
    %c0_1 = arith.constant 0 : index
    %c0_2 = arith.constant 0 : index
    %1 = vector.load %arg2[%c0_1, %c0_2] : memref<32x128xbf16, #tpu.memory_space<vmem>>, vector<32x128xbf16>
    %cst = arith.constant dense<0.000000e+00> : vector<16x128xf32>
    %2 = tpu.matmul %0, %1, %cst {dimension_numbers = #tpu.dot_dimension_numbers<[1], [0], [0], [1], [0, 0, 1, 1], [], []>} : vector<16x32xbf16>, vector<32x128xbf16>, vector<16x128xf32> -> vector<16x128xf32>
    %c0_3 = arith.constant 0 : index
    %c0_4 = arith.constant 0 : index
    %3 = vector.load %arg4[%c0_3, %c0_4] : memref<1x128xf32, #tpu.memory_space<vmem>>, vector<1x128xf32>
    %4 = vector.broadcast %3 : vector<1x128xf32> to vector<16x128xf32>
    %5 = arith.addf %2, %4 : vector<16x128xf32>
    %c0_5 = arith.constant 0 : index
    %c0_6 = arith.constant 0 : index
    %6 = vector.load %arg3[%c0_5, %c0_6] : memref<32x128xbf16, #tpu.memory_space<vmem>>, vector<32x128xbf16>
    %cst_7 = arith.constant 0.000000e+00 : f32
    %7 = vector.broadcast %cst_7 : f32 to vector<2x32xf32>
    %cst_8 = arith.constant 0.000000e+00 : f32
    %8 = vector.broadcast %cst_8 : f32 to vector<2x32xf32>
    %9 = vector.extract_strided_slice %5 {offsets = [0, 0], sizes = [2, 128], strides = [1, 1]} : vector<16x128xf32> to vector<2x128xf32>
    %10 = arith.truncf %7 : vector<2x32xf32> to vector<2x32xbf16>
    %cst_9 = arith.constant dense<0.000000e+00> : vector<2x128xf32>
    %11 = tpu.matmul %10, %6, %cst_9 {dimension_numbers = #tpu.dot_dimension_numbers<[1], [0], [0], [1], [0, 0, 1, 1], [], []>} : vector<2x32xbf16>, vector<32x128xbf16>, vector<2x128xf32> -> vector<2x128xf32>
    %12 = arith.addf %9, %11 : vector<2x128xf32>
    %13 = vector.extract_strided_slice %12 {offsets = [0, 0], sizes = [2, 32], strides = [1, 1]} : vector<2x128xf32> to vector<2x32xf32>
    %14 = arith.negf %13 : vector<2x32xf32>
    %15 = math.exp %14 : vector<2x32xf32>
    %cst_10 = arith.constant 1.000000e+00 : f32
    %16 = vector.broadcast %cst_10 : f32 to vector<2x32xf32>
    %17 = arith.addf %16, %15 : vector<2x32xf32>
    %18 = arith.divf %16, %17 : vector<2x32xf32>
    %19 = vector.extract_strided_slice %12 {offsets = [0, 32], sizes = [2, 32], strides = [1, 1]} : vector<2x128xf32> to vector<2x32xf32>
    %20 = arith.negf %19 : vector<2x32xf32>
    %21 = math.exp %20 : vector<2x32xf32>
    %cst_11 = arith.constant 1.000000e+00 : f32
    %22 = vector.broadcast %cst_11 : f32 to vector<2x32xf32>
    %23 = arith.addf %22, %21 : vector<2x32xf32>
    %24 = arith.divf %22, %23 : vector<2x32xf32>
    %25 = vector.extract_strided_slice %12 {offsets = [0, 64], sizes = [2, 32], strides = [1, 1]} : vector<2x128xf32> to vector<2x32xf32>
    %26 = math.tanh %25 : vector<2x32xf32>
    %27 = vector.extract_strided_slice %12 {offsets = [0, 96], sizes = [2, 32], strides = [1, 1]} : vector<2x128xf32> to vector<2x32xf32>
    %28 = arith.negf %27 : vector<2x32xf32>
    %29 = math.exp %28 : vector<2x32xf32>
    %cst_12 = arith.constant 1.000000e+00 : f32
    %30 = vector.broadcast %cst_12 : f32 to vector<2x32xf32>
    %31 = arith.addf %30, %29 : vector<2x32xf32>
    %32 = arith.divf %30, %31 : vector<2x32xf32>
    %33 = arith.mulf %24, %8 : vector<2x32xf32>
    %34 = arith.mulf %18, %26 : vector<2x32xf32>
    %35 = arith.addf %33, %34 : vector<2x32xf32>
    %36 = math.tanh %35 : vector<2x32xf32>
    %37 = arith.mulf %32, %36 : vector<2x32xf32>
    %c0_13 = arith.constant 0 : index
    %c0_14 = arith.constant 0 : index
    %38 = vector.load %arg8[%c0_13, %c0_14] : memref<16x32xf32, #tpu.memory_space<vmem>>, vector<2x32xf32>
    tpu.vector_store %arg8[%c0_13, %c0_14], %37 {strides = array<i32>} : memref<16x32xf32, #tpu.memory_space<vmem>>, vector<2x32xf32>,
    %39 = vector.extract_strided_slice %5 {offsets = [2, 0], sizes = [2, 128], strides = [1, 1]} : vector<16x128xf32> to vector<2x128xf32>
    %40 = arith.truncf %37 : vector<2x32xf32> to vector<2x32xbf16>
    %cst_15 = arith.constant dense<0.000000e+00> : vector<2x128xf32>
    %41 = tpu.matmul %40, %6, %cst_15 {dimension_numbers = #tpu.dot_dimension_numbers<[1], [0], [0], [1], [0, 0, 1, 1], [], []>} : vector<2x32xbf16>, vector<32x128xbf16>, vector<2x128xf32> -> vector<2x128xf32>
    %42 = arith.addf %39, %41 : vector<2x128xf32>
    %43 = vector.extract_strided_slice %42 {offsets = [0, 0], sizes = [2, 32], strides = [1, 1]} : vector<2x128xf32> to vector<2x32xf32>
    %44 = arith.negf %43 : vector<2x32xf32>
    %45 = math.exp %44 : vector<2x32xf32>
    %cst_16 = arith.constant 1.000000e+00 : f32
    %46 = vector.broadcast %cst_16 : f32 to vector<2x32xf32>
    %47 = arith.addf %46, %45 : vector<2x32xf32>
    %48 = arith.divf %46, %47 : vector<2x32xf32>
    %49 = vector.extract_strided_slice %42 {offsets = [0, 32], sizes = [2, 32], strides = [1, 1]} : vector<2x128xf32> to vector<2x32xf32>
    %50 = arith.negf %49 : vector<2x32xf32>
    %51 = math.exp %50 : vector<2x32xf32>
    %cst_17 = arith.constant 1.000000e+00 : f32
    %52 = vector.broadcast %cst_17 : f32 to vector<2x32xf32>
    %53 = arith.addf %52, %51 : vector<2x32xf32>
    %54 = arith.divf %52, %53 : vector<2x32xf32>
    %55 = vector.extract_strided_slice %42 {offsets = [0, 64], sizes = [2, 32], strides = [1, 1]} : vector<2x128xf32> to vector<2x32xf32>
    %56 = math.tanh %55 : vector<2x32xf32>
    %57 = vector.extract_strided_slice %42 {offsets = [0, 96], sizes = [2, 32], strides = [1, 1]} : vector<2x128xf32> to vector<2x32xf32>
    %58 = arith.negf %57 : vector<2x32xf32>
    %59 = math.exp %58 : vector<2x32xf32>
    %cst_18 = arith.constant 1.000000e+00 : f32
    %60 = vector.broadcast %cst_18 : f32 to vector<2x32xf32>
    %61 = arith.addf %60, %59 : vector<2x32xf32>
    %62 = arith.divf %60, %61 : vector<2x32xf32>
    %63 = arith.mulf %54, %35 : vector<2x32xf32>
    %64 = arith.mulf %48, %56 : vector<2x32xf32>
    %65 = arith.addf %63, %64 : vector<2x32xf32>
    %66 = math.tanh %65 : vector<2x32xf32>
    %67 = arith.mulf %62, %66 : vector<2x32xf32>
    %c2 = arith.constant 2 : index
    %c0_19 = arith.constant 0 : index
    %68 = vector.load %arg8[%c2, %c0_19] : memref<16x32xf32, #tpu.memory_space<vmem>>, vector<2x32xf32>
    tpu.vector_store %arg8[%c2, %c0_19], %67 {strides = array<i32>} : memref<16x32xf32, #tpu.memory_space<vmem>>, vector<2x32xf32>,
    %69 = vector.extract_strided_slice %5 {offsets = [4, 0], sizes = [2, 128], strides = [1, 1]} : vector<16x128xf32> to vector<2x128xf32>
    %70 = arith.truncf %67 : vector<2x32xf32> to vector<2x32xbf16>
    %cst_20 = arith.constant dense<0.000000e+00> : vector<2x128xf32>
    %71 = tpu.matmul %70, %6, %cst_20 {dimension_numbers = #tpu.dot_dimension_numbers<[1], [0], [0], [1], [0, 0, 1, 1], [], []>} : vector<2x32xbf16>, vector<32x128xbf16>, vector<2x128xf32> -> vector<2x128xf32>
    %72 = arith.addf %69, %71 : vector<2x128xf32>
    %73 = vector.extract_strided_slice %72 {offsets = [0, 0], sizes = [2, 32], strides = [1, 1]} : vector<2x128xf32> to vector<2x32xf32>
    %74 = arith.negf %73 : vector<2x32xf32>
    %75 = math.exp %74 : vector<2x32xf32>
    %cst_21 = arith.constant 1.000000e+00 : f32
    %76 = vector.broadcast %cst_21 : f32 to vector<2x32xf32>
    %77 = arith.addf %76, %75 : vector<2x32xf32>
    %78 = arith.divf %76, %77 : vector<2x32xf32>
    %79 = vector.extract_strided_slice %72 {offsets = [0, 32], sizes = [2, 32], strides = [1, 1]} : vector<2x128xf32> to vector<2x32xf32>
    %80 = arith.negf %79 : vector<2x32xf32>
    %81 = math.exp %80 : vector<2x32xf32>
    %cst_22 = arith.constant 1.000000e+00 : f32
    %82 = vector.broadcast %cst_22 : f32 to vector<2x32xf32>
    %83 = arith.addf %82, %81 : vector<2x32xf32>
    %84 = arith.divf %82, %83 : vector<2x32xf32>
    %85 = vector.extract_strided_slice %72 {offsets = [0, 64], sizes = [2, 32], strides = [1, 1]} : vector<2x128xf32> to vector<2x32xf32>
    %86 = math.tanh %85 : vector<2x32xf32>
    %87 = vector.extract_strided_slice %72 {offsets = [0, 96], sizes = [2, 32], strides = [1, 1]} : vector<2x128xf32> to vector<2x32xf32>
    %88 = arith.negf %87 : vector<2x32xf32>
    %89 = math.exp %88 : vector<2x32xf32>
    %cst_23 = arith.constant 1.000000e+00 : f32
    %90 = vector.broadcast %cst_23 : f32 to vector<2x32xf32>
    %91 = arith.addf %90, %89 : vector<2x32xf32>
    %92 = arith.divf %90, %91 : vector<2x32xf32>
    %93 = arith.mulf %84, %65 : vector<2x32xf32>
    %94 = arith.mulf %78, %86 : vector<2x32xf32>
    %95 = arith.addf %93, %94 : vector<2x32xf32>
    %96 = math.tanh %95 : vector<2x32xf32>
    %97 = arith.mulf %92, %96 : vector<2x32xf32>
    %c4 = arith.constant 4 : index
    %c0_24 = arith.constant 0 : index
    %98 = vector.load %arg8[%c4, %c0_24] : memref<16x32xf32, #tpu.memory_space<vmem>>, vector<2x32xf32>
    tpu.vector_store %arg8[%c4, %c0_24], %97 {strides = array<i32>} : memref<16x32xf32, #tpu.memory_space<vmem>>, vector<2x32xf32>,
    %99 = vector.extract_strided_slice %5 {offsets = [6, 0], sizes = [2, 128], strides = [1, 1]} : vector<16x128xf32> to vector<2x128xf32>
    %100 = arith.truncf %97 : vector<2x32xf32> to vector<2x32xbf16>
    %cst_25 = arith.constant dense<0.000000e+00> : vector<2x128xf32>
    %101 = tpu.matmul %100, %6, %cst_25 {dimension_numbers = #tpu.dot_dimension_numbers<[1], [0], [0], [1], [0, 0, 1, 1], [], []>} : vector<2x32xbf16>, vector<32x128xbf16>, vector<2x128xf32> -> vector<2x128xf32>
    %102 = arith.addf %99, %101 : vector<2x128xf32>
    %103 = vector.extract_strided_slice %102 {offsets = [0, 0], sizes = [2, 32], strides = [1, 1]} : vector<2x128xf32> to vector<2x32xf32>
    %104 = arith.negf %103 : vector<2x32xf32>
    %105 = math.exp %104 : vector<2x32xf32>
    %cst_26 = arith.constant 1.000000e+00 : f32
    %106 = vector.broadcast %cst_26 : f32 to vector<2x32xf32>
    %107 = arith.addf %106, %105 : vector<2x32xf32>
    %108 = arith.divf %106, %107 : vector<2x32xf32>
    %109 = vector.extract_strided_slice %102 {offsets = [0, 32], sizes = [2, 32], strides = [1, 1]} : vector<2x128xf32> to vector<2x32xf32>
    %110 = arith.negf %109 : vector<2x32xf32>
    %111 = math.exp %110 : vector<2x32xf32>
    %cst_27 = arith.constant 1.000000e+00 : f32
    %112 = vector.broadcast %cst_27 : f32 to vector<2x32xf32>
    %113 = arith.addf %112, %111 : vector<2x32xf32>
    %114 = arith.divf %112, %113 : vector<2x32xf32>
    %115 = vector.extract_strided_slice %102 {offsets = [0, 64], sizes = [2, 32], strides = [1, 1]} : vector<2x128xf32> to vector<2x32xf32>
    %116 = math.tanh %115 : vector<2x32xf32>
    %117 = vector.extract_strided_slice %102 {offsets = [0, 96], sizes = [2, 32], strides = [1, 1]} : vector<2x128xf32> to vector<2x32xf32>
    %118 = arith.negf %117 : vector<2x32xf32>
    %119 = math.exp %118 : vector<2x32xf32>
    %cst_28 = arith.constant 1.000000e+00 : f32
    %120 = vector.broadcast %cst_28 : f32 to vector<2x32xf32>
    %121 = arith.addf %120, %119 : vector<2x32xf32>
    %122 = arith.divf %120, %121 : vector<2x32xf32>
    %123 = arith.mulf %114, %95 : vector<2x32xf32>
    %124 = arith.mulf %108, %116 : vector<2x32xf32>
    %125 = arith.addf %123, %124 : vector<2x32xf32>
    %126 = math.tanh %125 : vector<2x32xf32>
    %127 = arith.mulf %122, %126 : vector<2x32xf32>
    %c6 = arith.constant 6 : index
    %c0_29 = arith.constant 0 : index
    %128 = vector.load %arg8[%c6, %c0_29] : memref<16x32xf32, #tpu.memory_space<vmem>>, vector<2x32xf32>
    tpu.vector_store %arg8[%c6, %c0_29], %127 {strides = array<i32>} : memref<16x32xf32, #tpu.memory_space<vmem>>, vector<2x32xf32>,
    %129 = vector.extract_strided_slice %5 {offsets = [8, 0], sizes = [2, 128], strides = [1, 1]} : vector<16x128xf32> to vector<2x128xf32>
    %130 = arith.truncf %127 : vector<2x32xf32> to vector<2x32xbf16>
    %cst_30 = arith.constant dense<0.000000e+00> : vector<2x128xf32>
    %131 = tpu.matmul %130, %6, %cst_30 {dimension_numbers = #tpu.dot_dimension_numbers<[1], [0], [0], [1], [0, 0, 1, 1], [], []>} : vector<2x32xbf16>, vector<32x128xbf16>, vector<2x128xf32> -> vector<2x128xf32>
    %132 = arith.addf %129, %131 : vector<2x128xf32>
    %133 = vector.extract_strided_slice %132 {offsets = [0, 0], sizes = [2, 32], strides = [1, 1]} : vector<2x128xf32> to vector<2x32xf32>
    %134 = arith.negf %133 : vector<2x32xf32>
    %135 = math.exp %134 : vector<2x32xf32>
    %cst_31 = arith.constant 1.000000e+00 : f32
    %136 = vector.broadcast %cst_31 : f32 to vector<2x32xf32>
    %137 = arith.addf %136, %135 : vector<2x32xf32>
    %138 = arith.divf %136, %137 : vector<2x32xf32>
    %139 = vector.extract_strided_slice %132 {offsets = [0, 32], sizes = [2, 32], strides = [1, 1]} : vector<2x128xf32> to vector<2x32xf32>
    %140 = arith.negf %139 : vector<2x32xf32>
    %141 = math.exp %140 : vector<2x32xf32>
    %cst_32 = arith.constant 1.000000e+00 : f32
    %142 = vector.broadcast %cst_32 : f32 to vector<2x32xf32>
    %143 = arith.addf %142, %141 : vector<2x32xf32>
    %144 = arith.divf %142, %143 : vector<2x32xf32>
    %145 = vector.extract_strided_slice %132 {offsets = [0, 64], sizes = [2, 32], strides = [1, 1]} : vector<2x128xf32> to vector<2x32xf32>
    %146 = math.tanh %145 : vector<2x32xf32>
    %147 = vector.extract_strided_slice %132 {offsets = [0, 96], sizes = [2, 32], strides = [1, 1]} : vector<2x128xf32> to vector<2x32xf32>
    %148 = arith.negf %147 : vector<2x32xf32>
    %149 = math.exp %148 : vector<2x32xf32>
    %cst_33 = arith.constant 1.000000e+00 : f32
    %150 = vector.broadcast %cst_33 : f32 to vector<2x32xf32>
    %151 = arith.addf %150, %149 : vector<2x32xf32>
    %152 = arith.divf %150, %151 : vector<2x32xf32>
    %153 = arith.mulf %144, %125 : vector<2x32xf32>
    %154 = arith.mulf %138, %146 : vector<2x32xf32>
    %155 = arith.addf %153, %154 : vector<2x32xf32>
    %156 = math.tanh %155 : vector<2x32xf32>
    %157 = arith.mulf %152, %156 : vector<2x32xf32>
    %c8 = arith.constant 8 : index
    %c0_34 = arith.constant 0 : index
    %158 = vector.load %arg8[%c8, %c0_34] : memref<16x32xf32, #tpu.memory_space<vmem>>, vector<2x32xf32>
    tpu.vector_store %arg8[%c8, %c0_34], %157 {strides = array<i32>} : memref<16x32xf32, #tpu.memory_space<vmem>>, vector<2x32xf32>,
    %159 = vector.extract_strided_slice %5 {offsets = [10, 0], sizes = [2, 128], strides = [1, 1]} : vector<16x128xf32> to vector<2x128xf32>
    %160 = arith.truncf %157 : vector<2x32xf32> to vector<2x32xbf16>
    %cst_35 = arith.constant dense<0.000000e+00> : vector<2x128xf32>
    %161 = tpu.matmul %160, %6, %cst_35 {dimension_numbers = #tpu.dot_dimension_numbers<[1], [0], [0], [1], [0, 0, 1, 1], [], []>} : vector<2x32xbf16>, vector<32x128xbf16>, vector<2x128xf32> -> vector<2x128xf32>
    %162 = arith.addf %159, %161 : vector<2x128xf32>
    %163 = vector.extract_strided_slice %162 {offsets = [0, 0], sizes = [2, 32], strides = [1, 1]} : vector<2x128xf32> to vector<2x32xf32>
    %164 = arith.negf %163 : vector<2x32xf32>
    %165 = math.exp %164 : vector<2x32xf32>
    %cst_36 = arith.constant 1.000000e+00 : f32
    %166 = vector.broadcast %cst_36 : f32 to vector<2x32xf32>
    %167 = arith.addf %166, %165 : vector<2x32xf32>
    %168 = arith.divf %166, %167 : vector<2x32xf32>
    %169 = vector.extract_strided_slice %162 {offsets = [0, 32], sizes = [2, 32], strides = [1, 1]} : vector<2x128xf32> to vector<2x32xf32>
    %170 = arith.negf %169 : vector<2x32xf32>
    %171 = math.exp %170 : vector<2x32xf32>
    %cst_37 = arith.constant 1.000000e+00 : f32
    %172 = vector.broadcast %cst_37 : f32 to vector<2x32xf32>
    %173 = arith.addf %172, %171 : vector<2x32xf32>
    %174 = arith.divf %172, %173 : vector<2x32xf32>
    %175 = vector.extract_strided_slice %162 {offsets = [0, 64], sizes = [2, 32], strides = [1, 1]} : vector<2x128xf32> to vector<2x32xf32>
    %176 = math.tanh %175 : vector<2x32xf32>
    %177 = vector.extract_strided_slice %162 {offsets = [0, 96], sizes = [2, 32], strides = [1, 1]} : vector<2x128xf32> to vector<2x32xf32>
    %178 = arith.negf %177 : vector<2x32xf32>
    %179 = math.exp %178 : vector<2x32xf32>
    %cst_38 = arith.constant 1.000000e+00 : f32
    %180 = vector.broadcast %cst_38 : f32 to vector<2x32xf32>
    %181 = arith.addf %180, %179 : vector<2x32xf32>
    %182 = arith.divf %180, %181 : vector<2x32xf32>
    %183 = arith.mulf %174, %155 : vector<2x32xf32>
    %184 = arith.mulf %168, %176 : vector<2x32xf32>
    %185 = arith.addf %183, %184 : vector<2x32xf32>
    %186 = math.tanh %185 : vector<2x32xf32>
    %187 = arith.mulf %182, %186 : vector<2x32xf32>
    %c10 = arith.constant 10 : index
    %c0_39 = arith.constant 0 : index
    %188 = vector.load %arg8[%c10, %c0_39] : memref<16x32xf32, #tpu.memory_space<vmem>>, vector<2x32xf32>
    tpu.vector_store %arg8[%c10, %c0_39], %187 {strides = array<i32>} : memref<16x32xf32, #tpu.memory_space<vmem>>, vector<2x32xf32>,
    %189 = vector.extract_strided_slice %5 {offsets = [12, 0], sizes = [2, 128], strides = [1, 1]} : vector<16x128xf32> to vector<2x128xf32>
    %190 = arith.truncf %187 : vector<2x32xf32> to vector<2x32xbf16>
    %cst_40 = arith.constant dense<0.000000e+00> : vector<2x128xf32>
    %191 = tpu.matmul %190, %6, %cst_40 {dimension_numbers = #tpu.dot_dimension_numbers<[1], [0], [0], [1], [0, 0, 1, 1], [], []>} : vector<2x32xbf16>, vector<32x128xbf16>, vector<2x128xf32> -> vector<2x128xf32>
    %192 = arith.addf %189, %191 : vector<2x128xf32>
    %193 = vector.extract_strided_slice %192 {offsets = [0, 0], sizes = [2, 32], strides = [1, 1]} : vector<2x128xf32> to vector<2x32xf32>
    %194 = arith.negf %193 : vector<2x32xf32>
    %195 = math.exp %194 : vector<2x32xf32>
    %cst_41 = arith.constant 1.000000e+00 : f32
    %196 = vector.broadcast %cst_41 : f32 to vector<2x32xf32>
    %197 = arith.addf %196, %195 : vector<2x32xf32>
    %198 = arith.divf %196, %197 : vector<2x32xf32>
    %199 = vector.extract_strided_slice %192 {offsets = [0, 32], sizes = [2, 32], strides = [1, 1]} : vector<2x128xf32> to vector<2x32xf32>
    %200 = arith.negf %199 : vector<2x32xf32>
    %201 = math.exp %200 : vector<2x32xf32>
    %cst_42 = arith.constant 1.000000e+00 : f32
    %202 = vector.broadcast %cst_42 : f32 to vector<2x32xf32>
    %203 = arith.addf %202, %201 : vector<2x32xf32>
    %204 = arith.divf %202, %203 : vector<2x32xf32>
    %205 = vector.extract_strided_slice %192 {offsets = [0, 64], sizes = [2, 32], strides = [1, 1]} : vector<2x128xf32> to vector<2x32xf32>
    %206 = math.tanh %205 : vector<2x32xf32>
    %207 = vector.extract_strided_slice %192 {offsets = [0, 96], sizes = [2, 32], strides = [1, 1]} : vector<2x128xf32> to vector<2x32xf32>
    %208 = arith.negf %207 : vector<2x32xf32>
    %209 = math.exp %208 : vector<2x32xf32>
    %cst_43 = arith.constant 1.000000e+00 : f32
    %210 = vector.broadcast %cst_43 : f32 to vector<2x32xf32>
    %211 = arith.addf %210, %209 : vector<2x32xf32>
    %212 = arith.divf %210, %211 : vector<2x32xf32>
    %213 = arith.mulf %204, %185 : vector<2x32xf32>
    %214 = arith.mulf %198, %206 : vector<2x32xf32>
    %215 = arith.addf %213, %214 : vector<2x32xf32>
    %216 = math.tanh %215 : vector<2x32xf32>
    %217 = arith.mulf %212, %216 : vector<2x32xf32>
    %c12 = arith.constant 12 : index
    %c0_44 = arith.constant 0 : index
    %218 = vector.load %arg8[%c12, %c0_44] : memref<16x32xf32, #tpu.memory_space<vmem>>, vector<2x32xf32>
    tpu.vector_store %arg8[%c12, %c0_44], %217 {strides = array<i32>} : memref<16x32xf32, #tpu.memory_space<vmem>>, vector<2x32xf32>,
    %219 = vector.extract_strided_slice %5 {offsets = [14, 0], sizes = [2, 128], strides = [1, 1]} : vector<16x128xf32> to vector<2x128xf32>
    %220 = arith.truncf %217 : vector<2x32xf32> to vector<2x32xbf16>
    %cst_45 = arith.constant dense<0.000000e+00> : vector<2x128xf32>
    %221 = tpu.matmul %220, %6, %cst_45 {dimension_numbers = #tpu.dot_dimension_numbers<[1], [0], [0], [1], [0, 0, 1, 1], [], []>} : vector<2x32xbf16>, vector<32x128xbf16>, vector<2x128xf32> -> vector<2x128xf32>
    %222 = arith.addf %219, %221 : vector<2x128xf32>
    %223 = vector.extract_strided_slice %222 {offsets = [0, 0], sizes = [2, 32], strides = [1, 1]} : vector<2x128xf32> to vector<2x32xf32>
    %224 = arith.negf %223 : vector<2x32xf32>
    %225 = math.exp %224 : vector<2x32xf32>
    %cst_46 = arith.constant 1.000000e+00 : f32
    %226 = vector.broadcast %cst_46 : f32 to vector<2x32xf32>
    %227 = arith.addf %226, %225 : vector<2x32xf32>
    %228 = arith.divf %226, %227 : vector<2x32xf32>
    %229 = vector.extract_strided_slice %222 {offsets = [0, 32], sizes = [2, 32], strides = [1, 1]} : vector<2x128xf32> to vector<2x32xf32>
    %230 = arith.negf %229 : vector<2x32xf32>
    %231 = math.exp %230 : vector<2x32xf32>
    %cst_47 = arith.constant 1.000000e+00 : f32
    %232 = vector.broadcast %cst_47 : f32 to vector<2x32xf32>
    %233 = arith.addf %232, %231 : vector<2x32xf32>
    %234 = arith.divf %232, %233 : vector<2x32xf32>
    %235 = vector.extract_strided_slice %222 {offsets = [0, 64], sizes = [2, 32], strides = [1, 1]} : vector<2x128xf32> to vector<2x32xf32>
    %236 = math.tanh %235 : vector<2x32xf32>
    %237 = vector.extract_strided_slice %222 {offsets = [0, 96], sizes = [2, 32], strides = [1, 1]} : vector<2x128xf32> to vector<2x32xf32>
    %238 = arith.negf %237 : vector<2x32xf32>
    %239 = math.exp %238 : vector<2x32xf32>
    %cst_48 = arith.constant 1.000000e+00 : f32
    %240 = vector.broadcast %cst_48 : f32 to vector<2x32xf32>
    %241 = arith.addf %240, %239 : vector<2x32xf32>
    %242 = arith.divf %240, %241 : vector<2x32xf32>
    %243 = arith.mulf %234, %215 : vector<2x32xf32>
    %244 = arith.mulf %228, %236 : vector<2x32xf32>
    %245 = arith.addf %243, %244 : vector<2x32xf32>
    %246 = math.tanh %245 : vector<2x32xf32>
    %247 = arith.mulf %242, %246 : vector<2x32xf32>
    %c14 = arith.constant 14 : index
    %c0_49 = arith.constant 0 : index
    %248 = vector.load %arg8[%c14, %c0_49] : memref<16x32xf32, #tpu.memory_space<vmem>>, vector<2x32xf32>
    tpu.vector_store %arg8[%c14, %c0_49], %247 {strides = array<i32>} : memref<16x32xf32, #tpu.memory_space<vmem>>, vector<2x32xf32>,
    %c0_50 = arith.constant 0 : index
    %c0_51 = arith.constant 0 : index
    %249 = vector.load %arg8[%c0_50, %c0_51] : memref<16x32xf32, #tpu.memory_space<vmem>>, vector<16x32xf32>
    %250 = arith.truncf %249 : vector<16x32xf32> to vector<16x32xbf16>
    %c0_52 = arith.constant 0 : index
    %c0_53 = arith.constant 0 : index
    %251 = vector.load %arg5[%c0_52, %c0_53] : memref<32x128xbf16, #tpu.memory_space<vmem>>, vector<32x128xbf16>
    %cst_54 = arith.constant dense<0.000000e+00> : vector<16x128xf32>
    %252 = tpu.matmul %250, %251, %cst_54 {dimension_numbers = #tpu.dot_dimension_numbers<[1], [0], [0], [1], [0, 0, 1, 1], [], []>} : vector<16x32xbf16>, vector<32x128xbf16>, vector<16x128xf32> -> vector<16x128xf32>
    %c0_55 = arith.constant 0 : index
    %c0_56 = arith.constant 0 : index
    %253 = vector.load %arg6[%c0_55, %c0_56] : memref<1x128xf32, #tpu.memory_space<vmem>>, vector<1x128xf32>
    %254 = vector.broadcast %253 : vector<1x128xf32> to vector<16x128xf32>
    %255 = arith.addf %252, %254 : vector<16x128xf32>
    %c0_57 = arith.constant 0 : index
    %c0_58 = arith.constant 0 : index
    %256 = vector.load %arg7[%c0_57, %c0_58] : memref<16x128xf32, #tpu.memory_space<vmem>>, vector<16x128xf32>
    tpu.vector_store %arg7[%c0_57, %c0_58], %255 {strides = array<i32>} : memref<16x128xf32, #tpu.memory_space<vmem>>, vector<16x128xf32>,
    return
  }
  func.func @transform_0(%arg0: i32) -> (i32, i32) {
    %c0_i32 = arith.constant 0 : i32
    %c0_i32_0 = arith.constant 0 : i32
    %c0_i32_1 = arith.constant 0 : i32
    return %c0_i32, %c0_i32_0 : i32, i32
  }
  func.func @transform_1(%arg0: i32) -> (i32, i32) {
    %c0_i32 = arith.constant 0 : i32
    %c0_i32_0 = arith.constant 0 : i32
    %c0_i32_1 = arith.constant 0 : i32
    return %c0_i32, %c0_i32_0 : i32, i32
  }
  func.func @transform_2(%arg0: i32) -> (i32, i32) {
    %c0_i32 = arith.constant 0 : i32
    %c0_i32_0 = arith.constant 0 : i32
    %c0_i32_1 = arith.constant 0 : i32
    return %c0_i32, %c0_i32_0 : i32, i32
  }
  func.func @transform_3(%arg0: i32) -> (i32, i32) {
    %c0_i32 = arith.constant 0 : i32
    %c0_i32_0 = arith.constant 0 : i32
    %c0_i32_1 = arith.constant 0 : i32
    return %c0_i32, %c0_i32_0 : i32, i32
  }
  func.func @transform_4(%arg0: i32) -> (i32, i32) {
    %c0_i32 = arith.constant 0 : i32
    %c0_i32_0 = arith.constant 0 : i32
    %c0_i32_1 = arith.constant 0 : i32
    return %c0_i32, %c0_i32_0 : i32, i32
  }
  func.func @transform_5(%arg0: i32) -> (i32, i32) {
    %c0_i32 = arith.constant 0 : i32
    %c0_i32_0 = arith.constant 0 : i32
    %c0_i32_1 = arith.constant 0 : i32
    return %c0_i32, %c0_i32_0 : i32, i32
  }
  func.func @transform_6(%arg0: i32) -> (i32, i32) {
    %c0_i32 = arith.constant 0 : i32
    %c0_i32_0 = arith.constant 0 : i32
    %c0_i32_1 = arith.constant 0 : i32
    return %c0_i32, %c0_i32_0 : i32, i32
  }
}

</mosaic_0001>

<llo_original>
// kernel: pos_predictor_forward.2
$region0: #{pos_predictor_forward.2}
  #allocation0 [shape = 'u32[]', space=smem, size = 0x4, offset = 0x4, fixed_abs, tag = 'smem constant byte address 0x4 - core index']
  #allocation1 [shape = 'u32[144,128]{1,0:T(1,128)}', space=vmem, size = 0x12000, scoped, tag = 'internal scratch']
  %s0 = inlined_call_operand.vmem [shape: bf16[96,16], index: 0, kind: input, shape index: {}]
  %s1 = inlined_call_operand.vmem [shape: bf16[16,48], index: 1, kind: input, shape index: {}]
  %s2 = inlined_call_operand.vmem [shape: bf16[16,48], index: 2, kind: input, shape index: {}]
  %s3 = inlined_call_operand.vmem [shape: f32[1,48], index: 3, kind: input, shape index: {}]
  %s4 = inlined_call_operand.vmem [shape: f32[1,48], index: 4, kind: input, shape index: {}]
  %s5 = inlined_call_operand.vmem [shape: f32[16,16], index: 5, kind: output, shape index: {}]
  %s6 = sld [smem:[#allocation0]]
  $region30: #{pos_predictor_forward.2} parent=0
    _
  %s8 = ssub.s32 1, %s6
  %s9 = scalar_select 0, %s8, %s6
  // Predicated region
  $region2: #{pos_predictor_forward.2} parent=0 // pred_check
    _
  $region3: #{pos_predictor_forward.2} parent=0 // pred_check_branch
    %11 = sbr.rel (0) target = $region5
  $region4: #{pos_predictor_forward.2} parent=0 // pred_region
    _
  $region5: #{pos_predictor_forward.2} parent=0 // pred_fallthru
    _
  // Predicated region
  $region6: #{pos_predictor_forward.2} parent=0 // pred_check
    _
  $region7: #{pos_predictor_forward.2} parent=0 // pred_check_branch
    %13 = sbr.rel (0) target = $region9
  $region8: #{pos_predictor_forward.2} parent=0 // pred_region
    _
  $region9: #{pos_predictor_forward.2} parent=0 // pred_fallthru
    _
  // Predicated region
  $region10: #{pos_predictor_forward.2} parent=0 // pred_check
    _
  $region11: #{pos_predictor_forward.2} parent=0 // pred_check_branch
    %15 = sbr.rel (0) target = $region13
  $region12: #{pos_predictor_forward.2} parent=0 // pred_region
    _
  $region13: #{pos_predictor_forward.2} parent=0 // pred_fallthru
    _
  // Predicated region
  $region14: #{pos_predictor_forward.2} parent=0 // pred_check
    _
  $region15: #{pos_predictor_forward.2} parent=0 // pred_check_branch
    %17 = sbr.rel (0) target = $region17
  $region16: #{pos_predictor_forward.2} parent=0 // pred_region
    _
  $region17: #{pos_predictor_forward.2} parent=0 // pred_fallthru
    _
  // Predicated region
  $region18: #{pos_predictor_forward.2} parent=0 // pred_check
    _
  $region19: #{pos_predictor_forward.2} parent=0 // pred_check_branch
    %19 = sbr.rel (0) target = $region21
  $region20: #{pos_predictor_forward.2} parent=0 // pred_region
    _
  $region21: #{pos_predictor_forward.2} parent=0 // pred_fallthru
    _
  %v21 = vld [vmem:[%s0] sm:$0xf]
  %v22 = vld [vmem:[%s0 + $0x4] sm:$0xf]
  %v23 = vld [vmem:[%s0 + $0x8] sm:$0xf]
  %v24 = vld [vmem:[%s0 + $0xc] sm:$0xf]
  %v25 = vld [vmem:[%s0 + $0x10] sm:$0xf]
  %v26 = vld [vmem:[%s0 + $0x14] sm:$0xf]
  %v27 = vld [vmem:[%s0 + $0x18] sm:$0xf]
  %v28 = vld [vmem:[%s0 + $0x1c] sm:$0xf]
  %v29 = vld [vmem:[%s0 + $0x20] sm:$0xf]
  %v30 = vld [vmem:[%s0 + $0x24] sm:$0xf]
  %v31 = vld [vmem:[%s0 + $0x28] sm:$0xf]
  %v32 = vld [vmem:[%s0 + $0x2c] sm:$0xf]
  %v33 = vld [vmem:[%s1] sm:$0xf]
  %v34 = vld [vmem:[%s1 + $0x4] sm:$0xf]
  %v35 = vld [vmem:[%s3] sm:$0x1]
  %v37 = vlaneseq
  %v38 = vshrl.u32 %v37, 7
  %v39 = vsub.s32 0, %v38
  %v40 = vrot.slane %v35, %v39
  %v54 = vunpack.c.l.b16 %v21
  %v55 = vunpack.c.l.b16 %v22
  %v56 = vunpack.c.l.b16 %v23
  %v57 = vunpack.c.l.b16 %v24
  %v58 = vunpack.c.l.b16 %v25
  %v59 = vunpack.c.l.b16 %v26
  %v60 = vunpack.c.l.b16 %v27
  %v61 = vunpack.c.l.b16 %v28
  %v62 = vunpack.c.l.b16 %v29
  %v63 = vunpack.c.l.b16 %v30
  %v64 = vunpack.c.l.b16 %v31
  %v65 = vunpack.c.l.b16 %v32
  %v66 = vpack.c.b16 %v55, %v54
  %v67 = vpack.c.b16 %v57, %v56
  %v68 = vpack.c.b16 %v59, %v58
  %v69 = vpack.c.b16 %v61, %v60
  %v70 = vpack.c.b16 %v63, %v62
  %v71 = vpack.c.b16 %v65, %v64
  %v74 = vunpack.c.l.b16 %v33
  %v75 = vunpack.c.l.b16 %v34
  %v76 = vpack.c.b16 %v75, %v74
  %vm78 = vcmask 130048
  %v80 = vsel %vm78, %v66, 0
  %v83 = vsel %vm78, %v67, 0
  %v86 = vsel %vm78, %v68, 0
  %v89 = vsel %vm78, %v69, 0
  %v92 = vsel %vm78, %v70, 0
  %v95 = vsel %vm78, %v71, 0
  %97 = vmatprep.subr.bf16.mxu0 0
  %98 = vmatpush1.bf16.msra.mxu0 %v76
  %99 = vmatprep.subr.bf16.mxu0 0
  %100 = vmatpush1.bf16.msra.mxu0 0
  %101 = vmatprep.subr.bf16.mxu0 0
  %102 = vmatpush1.bf16.msra.mxu0 0
  %103 = vmatprep.subr.bf16.mxu0 0
  %104 = vmatpush1.bf16.msra.mxu0 0
  %105 = vmatprep.subr.bf16.mxu0 0
  %106 = vmatpush1.bf16.msra.mxu0 0
  %107 = vmatprep.subr.bf16.mxu0 0
  %108 = vmatpush1.bf16.msra.mxu0 0
  %109 = vmatprep.subr.bf16.mxu0 0
  %110 = vmatpush1.bf16.msra.mxu0 0
  %111 = vmatprep.subr.bf16.mxu0 0
  %112 = vmatpush1.bf16.msra.mxu0 0
  %113 = vmatprep.subr.bf16.mxu0 0
  %114 = vmatpush1.bf16.msra.mxu0 0
  %115 = vmatprep.subr.bf16.mxu0 0
  %116 = vmatpush1.bf16.msra.mxu0 0
  %117 = vmatprep.subr.bf16.mxu0 0
  %118 = vmatpush1.bf16.msra.mxu0 0
  %119 = vmatprep.subr.bf16.mxu0 0
  %120 = vmatpush1.bf16.msra.mxu0 0
  %121 = vmatprep.subr.bf16.mxu0 0
  %122 = vmatpush1.bf16.msra.mxu0 0
  %123 = vmatprep.subr.bf16.mxu0 0
  %124 = vmatpush1.bf16.msra.mxu0 0
  %125 = vmatprep.subr.bf16.mxu0 0
  %126 = vmatpush1.bf16.msra.mxu0 0
  %127 = vmatprep.subr.bf16.mxu0 0
  %128 = vmatpush1.bf16.msra.mxu0 0
  %129 = vmatprep.mubr.bf16.mxu0 0
  %130 = vmatmul.mubr.bf16.gmra.mrb[0].mxu0 %v80
  %v131 = vpop.f32.mrb[0].mxu0
  %v132 = vadd.f32 %v40, %v131
  %v133 = vpop.f32.mrb[0].mxu0
  %v134 = vpop.f32.mrb[0].mxu0
  %v135 = vadd.f32 %v40, %v134
  %v136 = vpop.f32.mrb[0].mxu0
  %137 = vmatprep.mubr.bf16.mxu0 0
  %138 = vmatmul.mubr.bf16.gmra.mrb[0].mxu0 %v83
  %v139 = vpop.f32.mrb[0].mxu0
  %v140 = vadd.f32 %v40, %v139
  %v141 = vpop.f32.mrb[0].mxu0
  %v142 = vpop.f32.mrb[0].mxu0
  %v143 = vadd.f32 %v40, %v142
  %v144 = vpop.f32.mrb[0].mxu0
  %145 = vmatprep.mubr.bf16.mxu0 0
  %146 = vmatmul.mubr.bf16.gmra.mrb[0].mxu0 %v86
  %v147 = vpop.f32.mrb[0].mxu0
  %v148 = vadd.f32 %v40, %v147
  %v149 = vpop.f32.mrb[0].mxu0
  %v150 = vpop.f32.mrb[0].mxu0
  %v151 = vadd.f32 %v40, %v150
  %v152 = vpop.f32.mrb[0].mxu0
  %153 = vmatprep.mubr.bf16.mxu0 0
  %154 = vmatmul.mubr.bf16.gmra.mrb[0].mxu0 %v89
  %v155 = vpop.f32.mrb[0].mxu0
  %v156 = vadd.f32 %v40, %v155
  %v157 = vpop.f32.mrb[0].mxu0
  %v158 = vpop.f32.mrb[0].mxu0
  %v159 = vadd.f32 %v40, %v158
  %v160 = vpop.f32.mrb[0].mxu0
  %161 = vmatprep.mubr.bf16.mxu0 0
  %162 = vmatmul.mubr.bf16.gmra.mrb[0].mxu0 %v92
  %v163 = vpop.f32.mrb[0].mxu0
  %v164 = vadd.f32 %v40, %v163
  %v165 = vpop.f32.mrb[0].mxu0
  %v166 = vpop.f32.mrb[0].mxu0
  %v167 = vadd.f32 %v40, %v166
  %v168 = vpop.f32.mrb[0].mxu0
  %169 = vmatprep.mubr.bf16.mxu0 0
  %170 = vmatmul.mubr.bf16.gmra.mrb[0].mxu0 %v95
  %v171 = vpop.f32.mrb[0].mxu0
  %v172 = vadd.f32 %v40, %v171
  %v173 = vpop.f32.mrb[0].mxu0
  %v174 = vpop.f32.mrb[0].mxu0
  %v175 = vadd.f32 %v40, %v174
  %v176 = vpop.f32.mrb[0].mxu0
  %177 = vdwg.mxu0
  %v178 = vld [vmem:[%s2] sm:$0xf]
  %v179 = vld [vmem:[%s2 + $0x4] sm:$0xf]
  %v180 = vld [vmem:[%s4] sm:$0x1]
  %v182 = vlaneseq
  %v183 = vshrl.u32 %v182, 7
  %v184 = vsub.s32 0, %v183
  %v185 = vrot.slane %v180, %v184
  %v189 = vunpack.c.l.b16 %v178
  %v190 = vunpack.c.l.b16 %v179
  %v191 = vpack.c.b16 %v190, %v189
  %v194 = vsel %vm78, 0, 0
  %196 = vmatprep.subr.bf16.mxu0 0
  %197 = vmatpush1.bf16.msra.mxu0 %v191
  %198 = vmatprep.subr.bf16.mxu0 0
  %199 = vmatpush1.bf16.msra.mxu0 0
  %200 = vmatprep.subr.bf16.mxu0 0
  %201 = vmatpush1.bf16.msra.mxu0 0
  %202 = vmatprep.subr.bf16.mxu0 0
  %203 = vmatpush1.bf16.msra.mxu0 0
  %204 = vmatprep.subr.bf16.mxu0 0
  %205 = vmatpush1.bf16.msra.mxu0 0
  %206 = vmatprep.subr.bf16.mxu0 0
  %207 = vmatpush1.bf16.msra.mxu0 0
  %208 = vmatprep.subr.bf16.mxu0 0
  %209 = vmatpush1.bf16.msra.mxu0 0
  %210 = vmatprep.subr.bf16.mxu0 0
  %211 = vmatpush1.bf16.msra.mxu0 0
  %212 = vmatprep.subr.bf16.mxu0 0
  %213 = vmatpush1.bf16.msra.mxu0 0
  %214 = vmatprep.subr.bf16.mxu0 0
  %215 = vmatpush1.bf16.msra.mxu0 0
  %216 = vmatprep.subr.bf16.mxu0 0
  %217 = vmatpush1.bf16.msra.mxu0 0
  %218 = vmatprep.subr.bf16.mxu0 0
  %219 = vmatpush1.bf16.msra.mxu0 0
  %220 = vmatprep.subr.bf16.mxu0 0
  %221 = vmatpush1.bf16.msra.mxu0 0
  %222 = vmatprep.subr.bf16.mxu0 0
  %223 = vmatpush1.bf16.msra.mxu0 0
  %224 = vmatprep.subr.bf16.mxu0 0
  %225 = vmatpush1.bf16.msra.mxu0 0
  %226 = vmatprep.subr.bf16.mxu0 0
  %227 = vmatpush1.bf16.msra.mxu0 0
  %228 = vmatprep.mubr.bf16.mxu0 0
  %229 = vmatmul.mubr.bf16.gmra.mrb[0].mxu0 %v194
  %v230 = vpop.f32.mrb[0].mxu0
  %v231 = vadd.f32 %v185, %v230
  %v232 = vpop.f32.mrb[0].mxu0
  %v233 = vpop.f32.mrb[0].mxu0
  %v234 = vadd.f32 %v185, %v233
  %v235 = vpop.f32.mrb[0].mxu0
  %236 = vdwg.mxu0
  %v237 = vadd.f32 %v132, %v231
  %v238 = vadd.f32 %v135, %v234
  %v239 = vxor.u32 %v237, 2147483648
  %v240 = vxor.u32 %v238, 2147483648
  %v241 = vmul.f32 %v239, 1.442695
  %v242 = vpow.pop %v241
  %v243 = vmul.f32 %v240, 1.442695
  %v244 = vpow.pop %v243
  %v245 = vadd.f32 %v242, 1.0
  %v246 = vadd.f32 %v244, 1.0
  %v247 = vrcp.pop %v245
  %v248 = vmul.f32 1.0, %v247
  %v249 = vrcp.pop %v246
  %v250 = vmul.f32 1.0, %v249
  %253 = vrot.lane.b32.xlu0 %v231, 96
  %v254 = vpop.permute.xlu0 %253
  %255 = vrot.lane.b32.xlu0 %v234, 96
  %v256 = vpop.permute.xlu0 %255
  %v259 = vmul.f32 %v248, %v254
  %v260 = vmul.f32 %v250, %v256
  %263 = vrot.lane.b32.xlu0 %v259, 32
  %v264 = vpop.permute.xlu0 %263
  %265 = vrot.lane.b32.xlu0 %v260, 32
  %v266 = vpop.permute.xlu0 %265
  %v269 = vadd.f32 %v132, %v264
  %v270 = vadd.f32 %v135, %v266
  %v271 = vtanh.pop %v269
  %v272 = vtanh.pop %v270
  %v273 = vsub.f32 1.0, %v248
  %v274 = vsub.f32 1.0, %v250
  %277 = vrot.lane.b32.xlu0 %v271, 112
  %v278 = vpop.permute.xlu0 %277
  %279 = vrot.lane.b32.xlu0 %v272, 112
  %v280 = vpop.permute.xlu0 %279
  %v283 = vmul.f32 %v273, %v278
  %v284 = vmul.f32 %v274, %v280
  %v285 = vmul.f32 %v248, 0.0
  %v286 = vmul.f32 %v250, 0.0
  %v287 = vadd.f32 %v283, %v285
  %v288 = vadd.f32 %v284, %v286
  %v289 = vpack.c.bf16 %v288, %v287
  %291 = vrot.lane.b32.xlu0 %v289, 112
  %v292 = vpop.permute.xlu0 %291
  %v294 = vsel %vm78, %v292, 0
  %296 = vmatprep.subr.bf16.mxu0 0
  %297 = vmatpush1.bf16.msra.mxu0 %v191
  %298 = vmatprep.subr.bf16.mxu0 0
  %299 = vmatpush1.bf16.msra.mxu0 0
  %300 = vmatprep.subr.bf16.mxu0 0
  %301 = vmatpush1.bf16.msra.mxu0 0
  %302 = vmatprep.subr.bf16.mxu0 0
  %303 = vmatpush1.bf16.msra.mxu0 0
  %304 = vmatprep.subr.bf16.mxu0 0
  %305 = vmatpush1.bf16.msra.mxu0 0
  %306 = vmatprep.subr.bf16.mxu0 0
  %307 = vmatpush1.bf16.msra.mxu0 0
  %308 = vmatprep.subr.bf16.mxu0 0
  %309 = vmatpush1.bf16.msra.mxu0 0
  %310 = vmatprep.subr.bf16.mxu0 0
  %311 = vmatpush1.bf16.msra.mxu0 0
  %312 = vmatprep.subr.bf16.mxu0 0
  %313 = vmatpush1.bf16.msra.mxu0 0
  %314 = vmatprep.subr.bf16.mxu0 0
  %315 = vmatpush1.bf16.msra.mxu0 0
  %316 = vmatprep.subr.bf16.mxu0 0
  %317 = vmatpush1.bf16.msra.mxu0 0
  %318 = vmatprep.subr.bf16.mxu0 0
  %319 = vmatpush1.bf16.msra.mxu0 0
  %320 = vmatprep.subr.bf16.mxu0 0
  %321 = vmatpush1.bf16.msra.mxu0 0
  %322 = vmatprep.subr.bf16.mxu0 0
  %323 = vmatpush1.bf16.msra.mxu0 0
  %324 = vmatprep.subr.bf16.mxu0 0
  %325 = vmatpush1.bf16.msra.mxu0 0
  %326 = vmatprep.subr.bf16.mxu0 0
  %327 = vmatpush1.bf16.msra.mxu0 0
  %328 = vmatprep.mubr.bf16.mxu0 0
  %329 = vmatmul.mubr.bf16.gmra.mrb[0].mxu0 %v294
  %v330 = vpop.f32.mrb[0].mxu0
  %v331 = vadd.f32 %v185, %v330
  %v332 = vpop.f32.mrb[0].mxu0
  %v333 = vpop.f32.mrb[0].mxu0
  %v334 = vadd.f32 %v185, %v333
  %v335 = vpop.f32.mrb[0].mxu0
  %336 = vdwg.mxu0
  %v337 = vadd.f32 %v140, %v331
  %v338 = vadd.f32 %v143, %v334
  %v339 = vxor.u32 %v337, 2147483648
  %v340 = vxor.u32 %v338, 2147483648
  %v341 = vmul.f32 %v339, 1.442695
  %v342 = vpow.pop %v341
  %v343 = vmul.f32 %v340, 1.442695
  %v344 = vpow.pop %v343
  %v345 = vadd.f32 %v342, 1.0
  %v346 = vadd.f32 %v344, 1.0
  %v347 = vrcp.pop %v345
  %v348 = vmul.f32 1.0, %v347
  %v349 = vrcp.pop %v346
  %v350 = vmul.f32 1.0, %v349
  %353 = vrot.lane.b32.xlu0 %v331, 96
  %v354 = vpop.permute.xlu0 %353
  %355 = vrot.lane.b32.xlu0 %v334, 96
  %v356 = vpop.permute.xlu0 %355
  %v359 = vmul.f32 %v348, %v354
  %v360 = vmul.f32 %v350, %v356
  %363 = vrot.lane.b32.xlu0 %v359, 32
  %v364 = vpop.permute.xlu0 %363
  %365 = vrot.lane.b32.xlu0 %v360, 32
  %v366 = vpop.permute.xlu0 %365
  %v369 = vadd.f32 %v140, %v364
  %v370 = vadd.f32 %v143, %v366
  %v371 = vtanh.pop %v369
  %v372 = vtanh.pop %v370
  %v373 = vsub.f32 1.0, %v348
  %v374 = vsub.f32 1.0, %v350
  %377 = vrot.lane.b32.xlu0 %v371, 112
  %v378 = vpop.permute.xlu0 %377
  %379 = vrot.lane.b32.xlu0 %v372, 112
  %v380 = vpop.permute.xlu0 %379
  %v383 = vmul.f32 %v373, %v378
  %v384 = vmul.f32 %v374, %v380
  %v385 = vmul.f32 %v348, %v287
  %v386 = vmul.f32 %v350, %v288
  %v387 = vadd.f32 %v383, %v385
  %v388 = vadd.f32 %v384, %v386
  %v389 = vpack.c.bf16 %v388, %v387
  %391 = vrot.lane.b32.xlu0 %v389, 112
  %v392 = vpop.permute.xlu0 %391
  %v394 = vsel %vm78, %v392, 0
  %396 = vmatprep.subr.bf16.mxu0 0
  %397 = vmatpush1.bf16.msra.mxu0 %v191
  %398 = vmatprep.subr.bf16.mxu0 0
  %399 = vmatpush1.bf16.msra.mxu0 0
  %400 = vmatprep.subr.bf16.mxu0 0
  %401 = vmatpush1.bf16.msra.mxu0 0
  %402 = vmatprep.subr.bf16.mxu0 0
  %403 = vmatpush1.bf16.msra.mxu0 0
  %404 = vmatprep.subr.bf16.mxu0 0
  %405 = vmatpush1.bf16.msra.mxu0 0
  %406 = vmatprep.subr.bf16.mxu0 0
  %407 = vmatpush1.bf16.msra.mxu0 0
  %408 = vmatprep.subr.bf16.mxu0 0
  %409 = vmatpush1.bf16.msra.mxu0 0
  %410 = vmatprep.subr.bf16.mxu0 0
  %411 = vmatpush1.bf16.msra.mxu0 0
  %412 = vmatprep.subr.bf16.mxu0 0
  %413 = vmatpush1.bf16.msra.mxu0 0
  %414 = vmatprep.subr.bf16.mxu0 0
  %415 = vmatpush1.bf16.msra.mxu0 0
  %416 = vmatprep.subr.bf16.mxu0 0
  %417 = vmatpush1.bf16.msra.mxu0 0
  %418 = vmatprep.subr.bf16.mxu0 0
  %419 = vmatpush1.bf16.msra.mxu0 0
  %420 = vmatprep.subr.bf16.mxu0 0
  %421 = vmatpush1.bf16.msra.mxu0 0
  %422 = vmatprep.subr.bf16.mxu0 0
  %423 = vmatpush1.bf16.msra.mxu0 0
  %424 = vmatprep.subr.bf16.mxu0 0
  %425 = vmatpush1.bf16.msra.mxu0 0
  %426 = vmatprep.subr.bf16.mxu0 0
  %427 = vmatpush1.bf16.msra.mxu0 0
  %428 = vmatprep.mubr.bf16.mxu0 0
  %429 = vmatmul.mubr.bf16.gmra.mrb[0].mxu0 %v394
  %v430 = vpop.f32.mrb[0].mxu0
  %v431 = vadd.f32 %v185, %v430
  %v432 = vpop.f32.mrb[0].mxu0
  %v433 = vpop.f32.mrb[0].mxu0
  %v434 = vadd.f32 %v185, %v433
  %v435 = vpop.f32.mrb[0].mxu0
  %436 = vdwg.mxu0
  %v437 = vadd.f32 %v148, %v431
  %v438 = vadd.f32 %v151, %v434
  %v439 = vxor.u32 %v437, 2147483648
  %v440 = vxor.u32 %v438, 2147483648
  %v441 = vmul.f32 %v439, 1.442695
  %v442 = vpow.pop %v441
  %v443 = vmul.f32 %v440, 1.442695
  %v444 = vpow.pop %v443
  %v445 = vadd.f32 %v442, 1.0
  %v446 = vadd.f32 %v444, 1.0
  %v447 = vrcp.pop %v445
  %v448 = vmul.f32 1.0, %v447
  %v449 = vrcp.pop %v446
  %v450 = vmul.f32 1.0, %v449
  %453 = vrot.lane.b32.xlu0 %v431, 96
  %v454 = vpop.permute.xlu0 %453
  %455 = vrot.lane.b32.xlu0 %v434, 96
  %v456 = vpop.permute.xlu0 %455
  %v459 = vmul.f32 %v448, %v454
  %v460 = vmul.f32 %v450, %v456
  %463 = vrot.lane.b32.xlu0 %v459, 32
  %v464 = vpop.permute.xlu0 %463
  %465 = vrot.lane.b32.xlu0 %v460, 32
  %v466 = vpop.permute.xlu0 %465
  %v469 = vadd.f32 %v148, %v464
  %v470 = vadd.f32 %v151, %v466
  %v471 = vtanh.pop %v469
  %v472 = vtanh.pop %v470
  %v473 = vsub.f32 1.0, %v448
  %v474 = vsub.f32 1.0, %v450
  %477 = vrot.lane.b32.xlu0 %v471, 112
  %v478 = vpop.permute.xlu0 %477
  %479 = vrot.lane.b32.xlu0 %v472, 112
  %v480 = vpop.permute.xlu0 %479
  %v483 = vmul.f32 %v473, %v478
  %v484 = vmul.f32 %v474, %v480
  %v485 = vmul.f32 %v448, %v387
  %v486 = vmul.f32 %v450, %v388
  %v487 = vadd.f32 %v483, %v485
  %v488 = vadd.f32 %v484, %v486
  %v489 = vpack.c.bf16 %v488, %v487
  %491 = vrot.lane.b32.xlu0 %v489, 112
  %v492 = vpop.permute.xlu0 %491
  %v494 = vsel %vm78, %v492, 0
  %496 = vmatprep.subr.bf16.mxu0 0
  %497 = vmatpush1.bf16.msra.mxu0 %v191
  %498 = vmatprep.subr.bf16.mxu0 0
  %499 = vmatpush1.bf16.msra.mxu0 0
  %500 = vmatprep.subr.bf16.mxu0 0
  %501 = vmatpush1.bf16.msra.mxu0 0
  %502 = vmatprep.subr.bf16.mxu0 0
  %503 = vmatpush1.bf16.msra.mxu0 0
  %504 = vmatprep.subr.bf16.mxu0 0
  %505 = vmatpush1.bf16.msra.mxu0 0
  %506 = vmatprep.subr.bf16.mxu0 0
  %507 = vmatpush1.bf16.msra.mxu0 0
  %508 = vmatprep.subr.bf16.mxu0 0
  %509 = vmatpush1.bf16.msra.mxu0 0
  %510 = vmatprep.subr.bf16.mxu0 0
  %511 = vmatpush1.bf16.msra.mxu0 0
  %512 = vmatprep.subr.bf16.mxu0 0
  %513 = vmatpush1.bf16.msra.mxu0 0
  %514 = vmatprep.subr.bf16.mxu0 0
  %515 = vmatpush1.bf16.msra.mxu0 0
  %516 = vmatprep.subr.bf16.mxu0 0
  %517 = vmatpush1.bf16.msra.mxu0 0
  %518 = vmatprep.subr.bf16.mxu0 0
  %519 = vmatpush1.bf16.msra.mxu0 0
  %520 = vmatprep.subr.bf16.mxu0 0
  %521 = vmatpush1.bf16.msra.mxu0 0
  %522 = vmatprep.subr.bf16.mxu0 0
  %523 = vmatpush1.bf16.msra.mxu0 0
  %524 = vmatprep.subr.bf16.mxu0 0
  %525 = vmatpush1.bf16.msra.mxu0 0
  %526 = vmatprep.subr.bf16.mxu0 0
  %527 = vmatpush1.bf16.msra.mxu0 0
  %528 = vmatprep.mubr.bf16.mxu0 0
  %529 = vmatmul.mubr.bf16.gmra.mrb[0].mxu0 %v494
  %v530 = vpop.f32.mrb[0].mxu0
  %v531 = vadd.f32 %v185, %v530
  %v532 = vpop.f32.mrb[0].mxu0
  %v533 = vpop.f32.mrb[0].mxu0
  %v534 = vadd.f32 %v185, %v533
  %v535 = vpop.f32.mrb[0].mxu0
  %536 = vdwg.mxu0
  %v537 = vadd.f32 %v156, %v531
  %v538 = vadd.f32 %v159, %v534
  %v539 = vxor.u32 %v537, 2147483648
  %v540 = vxor.u32 %v538, 2147483648
  %v541 = vmul.f32 %v539, 1.442695
  %v542 = vpow.pop %v541
  %v543 = vmul.f32 %v540, 1.442695
  %v544 = vpow.pop %v543
  %v545 = vadd.f32 %v542, 1.0
  %v546 = vadd.f32 %v544, 1.0
  %v547 = vrcp.pop %v545
  %v548 = vmul.f32 1.0, %v547
  %v549 = vrcp.pop %v546
  %v550 = vmul.f32 1.0, %v549
  %553 = vrot.lane.b32.xlu0 %v531, 96
  %v554 = vpop.permute.xlu0 %553
  %555 = vrot.lane.b32.xlu0 %v534, 96
  %v556 = vpop.permute.xlu0 %555
  %v559 = vmul.f32 %v548, %v554
  %v560 = vmul.f32 %v550, %v556
  %563 = vrot.lane.b32.xlu0 %v559, 32
  %v564 = vpop.permute.xlu0 %563
  %565 = vrot.lane.b32.xlu0 %v560, 32
  %v566 = vpop.permute.xlu0 %565
  %v569 = vadd.f32 %v156, %v564
  %v570 = vadd.f32 %v159, %v566
  %v571 = vtanh.pop %v569
  %v572 = vtanh.pop %v570
  %v573 = vsub.f32 1.0, %v548
  %v574 = vsub.f32 1.0, %v550
  %577 = vrot.lane.b32.xlu0 %v571, 112
  %v578 = vpop.permute.xlu0 %577
  %579 = vrot.lane.b32.xlu0 %v572, 112
  %v580 = vpop.permute.xlu0 %579
  %v583 = vmul.f32 %v573, %v578
  %v584 = vmul.f32 %v574, %v580
  %v585 = vmul.f32 %v548, %v487
  %v586 = vmul.f32 %v550, %v488
  %v587 = vadd.f32 %v583, %v585
  %v588 = vadd.f32 %v584, %v586
  %v589 = vpack.c.bf16 %v588, %v587
  %591 = vrot.lane.b32.xlu0 %v589, 112
  %v592 = vpop.permute.xlu0 %591
  %v594 = vsel %vm78, %v592, 0
  %596 = vmatprep.subr.bf16.mxu0 0
  %597 = vmatpush1.bf16.msra.mxu0 %v191
  %598 = vmatprep.subr.bf16.mxu0 0
  %599 = vmatpush1.bf16.msra.mxu0 0
  %600 = vmatprep.subr.bf16.mxu0 0
  %601 = vmatpush1.bf16.msra.mxu0 0
  %602 = vmatprep.subr.bf16.mxu0 0
  %603 = vmatpush1.bf16.msra.mxu0 0
  %604 = vmatprep.subr.bf16.mxu0 0
  %605 = vmatpush1.bf16.msra.mxu0 0
  %606 = vmatprep.subr.bf16.mxu0 0
  %607 = vmatpush1.bf16.msra.mxu0 0
  %608 = vmatprep.subr.bf16.mxu0 0
  %609 = vmatpush1.bf16.msra.mxu0 0
  %610 = vmatprep.subr.bf16.mxu0 0
  %611 = vmatpush1.bf16.msra.mxu0 0
  %612 = vmatprep.subr.bf16.mxu0 0
  %613 = vmatpush1.bf16.msra.mxu0 0
  %614 = vmatprep.subr.bf16.mxu0 0
  %615 = vmatpush1.bf16.msra.mxu0 0
  %616 = vmatprep.subr.bf16.mxu0 0
  %617 = vmatpush1.bf16.msra.mxu0 0
  %618 = vmatprep.subr.bf16.mxu0 0
  %619 = vmatpush1.bf16.msra.mxu0 0
  %620 = vmatprep.subr.bf16.mxu0 0
  %621 = vmatpush1.bf16.msra.mxu0 0
  %622 = vmatprep.subr.bf16.mxu0 0
  %623 = vmatpush1.bf16.msra.mxu0 0
  %624 = vmatprep.subr.bf16.mxu0 0
  %625 = vmatpush1.bf16.msra.mxu0 0
  %626 = vmatprep.subr.bf16.mxu0 0
  %627 = vmatpush1.bf16.msra.mxu0 0
  %628 = vmatprep.mubr.bf16.mxu0 0
  %629 = vmatmul.mubr.bf16.gmra.mrb[0].mxu0 %v594
  %v630 = vpop.f32.mrb[0].mxu0
  %v631 = vadd.f32 %v185, %v630
  %v632 = vpop.f32.mrb[0].mxu0
  %v633 = vpop.f32.mrb[0].mxu0
  %v634 = vadd.f32 %v185, %v633
  %v635 = vpop.f32.mrb[0].mxu0
  %636 = vdwg.mxu0
  %v637 = vadd.f32 %v164, %v631
  %v638 = vadd.f32 %v167, %v634
  %v639 = vxor.u32 %v637, 2147483648
  %v640 = vxor.u32 %v638, 2147483648
  %v641 = vmul.f32 %v639, 1.442695
  %v642 = vpow.pop %v641
  %v643 = vmul.f32 %v640, 1.442695
  %v644 = vpow.pop %v643
  %v645 = vadd.f32 %v642, 1.0
  %v646 = vadd.f32 %v644, 1.0
  %v647 = vrcp.pop %v645
  %v648 = vmul.f32 1.0, %v647
  %v649 = vrcp.pop %v646
  %v650 = vmul.f32 1.0, %v649
  %653 = vrot.lane.b32.xlu0 %v631, 96
  %v654 = vpop.permute.xlu0 %653
  %655 = vrot.lane.b32.xlu0 %v634, 96
  %v656 = vpop.permute.xlu0 %655
  %v659 = vmul.f32 %v648, %v654
  %v660 = vmul.f32 %v650, %v656
  %663 = vrot.lane.b32.xlu0 %v659, 32
  %v664 = vpop.permute.xlu0 %663
  %665 = vrot.lane.b32.xlu0 %v660, 32
  %v666 = vpop.permute.xlu0 %665
  %v669 = vadd.f32 %v164, %v664
  %v670 = vadd.f32 %v167, %v666
  %v671 = vtanh.pop %v669
  %v672 = vtanh.pop %v670
  %v673 = vsub.f32 1.0, %v648
  %v674 = vsub.f32 1.0, %v650
  %677 = vrot.lane.b32.xlu0 %v671, 112
  %v678 = vpop.permute.xlu0 %677
  %679 = vrot.lane.b32.xlu0 %v672, 112
  %v680 = vpop.permute.xlu0 %679
  %v683 = vmul.f32 %v673, %v678
  %v684 = vmul.f32 %v674, %v680
  %v685 = vmul.f32 %v648, %v587
  %v686 = vmul.f32 %v650, %v588
  %v687 = vadd.f32 %v683, %v685
  %v688 = vadd.f32 %v684, %v686
  %v689 = vpack.c.bf16 %v688, %v687
  %691 = vrot.lane.b32.xlu0 %v689, 112
  %v692 = vpop.permute.xlu0 %691
  %v694 = vsel %vm78, %v692, 0
  %696 = vmatprep.subr.bf16.mxu0 0
  %697 = vmatpush1.bf16.msra.mxu0 %v191
  %698 = vmatprep.subr.bf16.mxu0 0
  %699 = vmatpush1.bf16.msra.mxu0 0
  %700 = vmatprep.subr.bf16.mxu0 0
  %701 = vmatpush1.bf16.msra.mxu0 0
  %702 = vmatprep.subr.bf16.mxu0 0
  %703 = vmatpush1.bf16.msra.mxu0 0
  %704 = vmatprep.subr.bf16.mxu0 0
  %705 = vmatpush1.bf16.msra.mxu0 0
  %706 = vmatprep.subr.bf16.mxu0 0
  %707 = vmatpush1.bf16.msra.mxu0 0
  %708 = vmatprep.subr.bf16.mxu0 0
  %709 = vmatpush1.bf16.msra.mxu0 0
  %710 = vmatprep.subr.bf16.mxu0 0
  %711 = vmatpush1.bf16.msra.mxu0 0
  %712 = vmatprep.subr.bf16.mxu0 0
  %713 = vmatpush1.bf16.msra.mxu0 0
  %714 = vmatprep.subr.bf16.mxu0 0
  %715 = vmatpush1.bf16.msra.mxu0 0
  %716 = vmatprep.subr.bf16.mxu0 0
  %717 = vmatpush1.bf16.msra.mxu0 0
  %718 = vmatprep.subr.bf16.mxu0 0
  %719 = vmatpush1.bf16.msra.mxu0 0
  %720 = vmatprep.subr.bf16.mxu0 0
  %721 = vmatpush1.bf16.msra.mxu0 0
  %722 = vmatprep.subr.bf16.mxu0 0
  %723 = vmatpush1.bf16.msra.mxu0 0
  %724 = vmatprep.subr.bf16.mxu0 0
  %725 = vmatpush1.bf16.msra.mxu0 0
  %726 = vmatprep.subr.bf16.mxu0 0
  %727 = vmatpush1.bf16.msra.mxu0 0
  %728 = vmatprep.mubr.bf16.mxu0 0
  %729 = vmatmul.mubr.bf16.gmra.mrb[0].mxu0 %v694
  %v730 = vpop.f32.mrb[0].mxu0
  %v731 = vadd.f32 %v185, %v730
  %v732 = vpop.f32.mrb[0].mxu0
  %v733 = vpop.f32.mrb[0].mxu0
  %v734 = vadd.f32 %v185, %v733
  %v735 = vpop.f32.mrb[0].mxu0
  %736 = vdwg.mxu0
  %v737 = vadd.f32 %v172, %v731
  %v738 = vadd.f32 %v175, %v734
  %v739 = vxor.u32 %v737, 2147483648
  %v740 = vxor.u32 %v738, 2147483648
  %v741 = vmul.f32 %v739, 1.442695
  %v742 = vpow.pop %v741
  %v743 = vmul.f32 %v740, 1.442695
  %v744 = vpow.pop %v743
  %v745 = vadd.f32 %v742, 1.0
  %v746 = vadd.f32 %v744, 1.0
  %v747 = vrcp.pop %v745
  %v748 = vmul.f32 1.0, %v747
  %v749 = vrcp.pop %v746
  %v750 = vmul.f32 1.0, %v749
  %753 = vrot.lane.b32.xlu0 %v731, 96
  %v754 = vpop.permute.xlu0 %753
  %755 = vrot.lane.b32.xlu0 %v734, 96
  %v756 = vpop.permute.xlu0 %755
  %v759 = vmul.f32 %v748, %v754
  %v760 = vmul.f32 %v750, %v756
  %763 = vrot.lane.b32.xlu0 %v759, 32
  %v764 = vpop.permute.xlu0 %763
  %765 = vrot.lane.b32.xlu0 %v760, 32
  %v766 = vpop.permute.xlu0 %765
  %v769 = vadd.f32 %v172, %v764
  %v770 = vadd.f32 %v175, %v766
  %v771 = vtanh.pop %v769
  %v772 = vtanh.pop %v770
  %v773 = vsub.f32 1.0, %v748
  %v774 = vsub.f32 1.0, %v750
  %777 = vrot.lane.b32.xlu0 %v771, 112
  %v778 = vpop.permute.xlu0 %777
  %779 = vrot.lane.b32.xlu0 %v772, 112
  %v780 = vpop.permute.xlu0 %779
  %v783 = vmul.f32 %v773, %v778
  %v784 = vmul.f32 %v774, %v780
  %v785 = vmul.f32 %v748, %v687
  %v786 = vmul.f32 %v750, %v688
  %v787 = vadd.f32 %v783, %v785
  %v788 = vadd.f32 %v784, %v786
  %791 = vrot.lane.b32.xlu0 %v787, 112
  %v792 = vpop.permute.xlu0 %791
  %793 = vrot.lane.b32.xlu0 %v788, 112
  %v794 = vpop.permute.xlu0 %793
  %797 = vst.msk [vmem:[%s5] sm:$0xff] %vm78, %v792
  %798 = vst.msk [vmem:[%s5 + $0x8] sm:$0xff] %vm78, %v794
  // Predicated region
  $region22: #{pos_predictor_forward.2} parent=0 // pred_check
    _
  $region23: #{pos_predictor_forward.2} parent=0 // pred_check_branch
    %800 = sbr.rel (0) target = $region25
  $region24: #{pos_predictor_forward.2} parent=0 // pred_region
    _
  $region25: #{pos_predictor_forward.2} parent=0 // pred_fallthru
    _
  // Predicated region
  $region26: #{pos_predictor_forward.2} parent=0 // pred_check
    _
  $region27: #{pos_predictor_forward.2} parent=0 // pred_check_branch
    %802 = sbr.rel (0) target = $region29
  $region28: #{pos_predictor_forward.2} parent=0 // pred_region
    _
  $region29: #{pos_predictor_forward.2} parent=0 // pred_fallthru
    _

// kernel: pos_predictor_forward.3
$region0: #{pos_predictor_forward.3}
  #allocation0 [shape = 'u32[]', space=smem, size = 0x4, offset = 0x4, fixed_abs, tag = 'smem constant byte address 0x4 - core index']
  #allocation1 [shape = 'u32[144,128]{1,0:T(1,128)}', space=vmem, size = 0x12000, scoped, tag = 'internal scratch']
  #allocation2 [shape = 'f32[16,32]{1,0:T(8,128)}', space=vmem, size = 0x2000, scoped, tag = 'scratch operand']
  %s0 = inlined_call_operand.vmem [shape: bf16[16,32], index: 0, kind: input, shape index: {}]
  %s1 = inlined_call_operand.vmem [shape: bf16[32,128], index: 1, kind: input, shape index: {}]
  %s2 = inlined_call_operand.vmem [shape: bf16[32,128], index: 2, kind: input, shape index: {}]
  %s3 = inlined_call_operand.vmem [shape: f32[1,128], index: 3, kind: input, shape index: {}]
  %s4 = inlined_call_operand.vmem [shape: bf16[32,128], index: 4, kind: input, shape index: {}]
  %s5 = inlined_call_operand.vmem [shape: f32[1,128], index: 5, kind: input, shape index: {}]
  %s6 = inlined_call_operand.vmem [shape: f32[16,128], index: 6, kind: output, shape index: {}]
  %s7 = sld [smem:[#allocation0]]
  $region34: #{pos_predictor_forward.3} parent=0
    _
  %s9 = ssub.s32 1, %s7
  %s10 = scalar_select 0, %s9, %s7
  // Predicated region
  $region2: #{pos_predictor_forward.3} parent=0 // pred_check
    _
  $region3: #{pos_predictor_forward.3} parent=0 // pred_check_branch
    %12 = sbr.rel (0) target = $region5
  $region4: #{pos_predictor_forward.3} parent=0 // pred_region
    _
  $region5: #{pos_predictor_forward.3} parent=0 // pred_fallthru
    _
  // Predicated region
  $region6: #{pos_predictor_forward.3} parent=0 // pred_check
    _
  $region7: #{pos_predictor_forward.3} parent=0 // pred_check_branch
    %14 = sbr.rel (0) target = $region9
  $region8: #{pos_predictor_forward.3} parent=0 // pred_region
    _
  $region9: #{pos_predictor_forward.3} parent=0 // pred_fallthru
    _
  // Predicated region
  $region10: #{pos_predictor_forward.3} parent=0 // pred_check
    _
  $region11: #{pos_predictor_forward.3} parent=0 // pred_check_branch
    %16 = sbr.rel (0) target = $region13
  $region12: #{pos_predictor_forward.3} parent=0 // pred_region
    _
  $region13: #{pos_predictor_forward.3} parent=0 // pred_fallthru
    _
  // Predicated region
  $region14: #{pos_predictor_forward.3} parent=0 // pred_check
    _
  $region15: #{pos_predictor_forward.3} parent=0 // pred_check_branch
    %18 = sbr.rel (0) target = $region17
  $region16: #{pos_predictor_forward.3} parent=0 // pred_region
    _
  $region17: #{pos_predictor_forward.3} parent=0 // pred_fallthru
    _
  // Predicated region
  $region18: #{pos_predictor_forward.3} parent=0 // pred_check
    _
  $region19: #{pos_predictor_forward.3} parent=0 // pred_check_branch
    %20 = sbr.rel (0) target = $region21
  $region20: #{pos_predictor_forward.3} parent=0 // pred_region
    _
  $region21: #{pos_predictor_forward.3} parent=0 // pred_fallthru
    _
  // Predicated region
  $region22: #{pos_predictor_forward.3} parent=0 // pred_check
    _
  $region23: #{pos_predictor_forward.3} parent=0 // pred_check_branch
    %22 = sbr.rel (0) target = $region25
  $region24: #{pos_predictor_forward.3} parent=0 // pred_region
    _
  $region25: #{pos_predictor_forward.3} parent=0 // pred_fallthru
    _
  %v24 = vld [vmem:[%s0] sm:$0xf]
  %v25 = vld [vmem:[%s0 + $0x4] sm:$0xf]
  %v26 = vld [vmem:[%s1] sm:$0xf]
  %v27 = vld [vmem:[%s1 + $0x4] sm:$0xf]
  %v28 = vld [vmem:[%s1 + $0x8] sm:$0xf]
  %v29 = vld [vmem:[%s1 + $0xc] sm:$0xf]
  %v30 = vld [vmem:[%s3] sm:$0x1]
  %v32 = vlaneseq
  %v33 = vshrl.u32 %v32, 7
  %v34 = vsub.s32 0, %v33
  %v35 = vrot.slane %v30, %v34
  %v39 = vunpack.c.l.b16 %v24
  %v40 = vunpack.c.l.b16 %v25
  %v41 = vpack.c.b16 %v40, %v39
  %v46 = vunpack.c.l.b16 %v26
  %v47 = vunpack.c.l.b16 %v27
  %v48 = vunpack.c.l.b16 %v28
  %v49 = vunpack.c.l.b16 %v29
  %v50 = vpack.c.b16 %v47, %v46
  %v51 = vpack.c.b16 %v49, %v48
  %vm54 = vcmask 261120
  %v56 = vsel %vm54, %v41, 0
  %58 = vmatprep.subr.bf16.mxu0 0
  %59 = vmatpush1.bf16.msra.mxu0 %v50
  %60 = vmatprep.subr.bf16.mxu0 0
  %61 = vmatpush1.bf16.msra.mxu0 %v51
  %62 = vmatprep.subr.bf16.mxu0 0
  %63 = vmatpush1.bf16.msra.mxu0 0
  %64 = vmatprep.subr.bf16.mxu0 0
  %65 = vmatpush1.bf16.msra.mxu0 0
  %66 = vmatprep.subr.bf16.mxu0 0
  %67 = vmatpush1.bf16.msra.mxu0 0
  %68 = vmatprep.subr.bf16.mxu0 0
  %69 = vmatpush1.bf16.msra.mxu0 0
  %70 = vmatprep.subr.bf16.mxu0 0
  %71 = vmatpush1.bf16.msra.mxu0 0
  %72 = vmatprep.subr.bf16.mxu0 0
  %73 = vmatpush1.bf16.msra.mxu0 0
  %74 = vmatprep.subr.bf16.mxu0 0
  %75 = vmatpush1.bf16.msra.mxu0 0
  %76 = vmatprep.subr.bf16.mxu0 0
  %77 = vmatpush1.bf16.msra.mxu0 0
  %78 = vmatprep.subr.bf16.mxu0 0
  %79 = vmatpush1.bf16.msra.mxu0 0
  %80 = vmatprep.subr.bf16.mxu0 0
  %81 = vmatpush1.bf16.msra.mxu0 0
  %82 = vmatprep.subr.bf16.mxu0 0
  %83 = vmatpush1.bf16.msra.mxu0 0
  %84 = vmatprep.subr.bf16.mxu0 0
  %85 = vmatpush1.bf16.msra.mxu0 0
  %86 = vmatprep.subr.bf16.mxu0 0
  %87 = vmatpush1.bf16.msra.mxu0 0
  %88 = vmatprep.subr.bf16.mxu0 0
  %89 = vmatpush1.bf16.msra.mxu0 0
  %90 = vmatprep.mubr.bf16.mxu0 0
  %91 = vmatmul.mubr.bf16.gmra.mrb[0].mxu0 %v56
  %v92 = vpop.f32.mrb[0].mxu0
  %v93 = vadd.f32 %v35, %v92
  %v94 = vpop.f32.mrb[0].mxu0
  %v95 = vpop.f32.mrb[0].mxu0
  %v96 = vadd.f32 %v35, %v95
  %v97 = vpop.f32.mrb[0].mxu0
  %98 = vdwg.mxu0
  %v99 = vld [vmem:[%s2] sm:$0xf]
  %v100 = vld [vmem:[%s2 + $0x4] sm:$0xf]
  %v101 = vld [vmem:[%s2 + $0x8] sm:$0xf]
  %v102 = vld [vmem:[%s2 + $0xc] sm:$0xf]
  %v107 = vunpack.c.l.b16 %v99
  %v108 = vunpack.c.l.b16 %v100
  %v109 = vunpack.c.l.b16 %v101
  %v110 = vunpack.c.l.b16 %v102
  %v111 = vpack.c.b16 %v108, %v107
  %v112 = vpack.c.b16 %v110, %v109
  %v116 = vsel %vm54, 0, 0
  %118 = vmatprep.subr.bf16.mxu0 0
  %119 = vmatpush1.bf16.msra.mxu0 %v111
  %120 = vmatprep.subr.bf16.mxu0 0
  %121 = vmatpush1.bf16.msra.mxu0 %v112
  %122 = vmatprep.subr.bf16.mxu0 0
  %123 = vmatpush1.bf16.msra.mxu0 0
  %124 = vmatprep.subr.bf16.mxu0 0
  %125 = vmatpush1.bf16.msra.mxu0 0
  %126 = vmatprep.subr.bf16.mxu0 0
  %127 = vmatpush1.bf16.msra.mxu0 0
  %128 = vmatprep.subr.bf16.mxu0 0
  %129 = vmatpush1.bf16.msra.mxu0 0
  %130 = vmatprep.subr.bf16.mxu0 0
  %131 = vmatpush1.bf16.msra.mxu0 0
  %132 = vmatprep.subr.bf16.mxu0 0
  %133 = vmatpush1.bf16.msra.mxu0 0
  %134 = vmatprep.subr.bf16.mxu0 0
  %135 = vmatpush1.bf16.msra.mxu0 0
  %136 = vmatprep.subr.bf16.mxu0 0
  %137 = vmatpush1.bf16.msra.mxu0 0
  %138 = vmatprep.subr.bf16.mxu0 0
  %139 = vmatpush1.bf16.msra.mxu0 0
  %140 = vmatprep.subr.bf16.mxu0 0
  %141 = vmatpush1.bf16.msra.mxu0 0
  %142 = vmatprep.subr.bf16.mxu0 0
  %143 = vmatpush1.bf16.msra.mxu0 0
  %144 = vmatprep.subr.bf16.mxu0 0
  %145 = vmatpush1.bf16.msra.mxu0 0
  %146 = vmatprep.subr.bf16.mxu0 0
  %147 = vmatpush1.bf16.msra.mxu0 0
  %148 = vmatprep.subr.bf16.mxu0 0
  %149 = vmatpush1.bf16.msra.mxu0 0
  %150 = vmatprep.mubr.bf16.mxu0 0
  %151 = vmatmul.mubr.bf16.gmra.mrb[0].mxu0 %v116
  %v152 = vpop.f32.mrb[0].mxu0
  %v153 = vadd.f32 0.0, %v152
  %v154 = vpop.f32.mrb[0].mxu0
  %v155 = vpop.f32.mrb[0].mxu0
  %v156 = vpop.f32.mrb[0].mxu0
  %157 = vdwg.mxu0
  %v158 = vadd.f32 %v93, %v153
  %v159 = vxor.u32 %v158, 2147483648
  %v160 = vmul.f32 %v159, 1.442695
  %v161 = vpow.pop %v160
  %v162 = vadd.f32 %v161, 1.0
  %v163 = vrcp.pop %v162
  %v164 = vmul.f32 1.0, %v163
  %v165 = vtanh.pop %v158
  %v166 = vmul.f32 %v164, 0.0
  %168 = vrot.lane.b32.xlu0 %v165, 64
  %v169 = vpop.permute.xlu0 %168
  %v171 = vmul.f32 %v164, %v169
  %173 = vrot.lane.b32.xlu0 %v171, 32
  %v174 = vpop.permute.xlu0 %173
  %v176 = vadd.f32 %v166, %v174
  %v177 = vtanh.pop %v176
  %179 = vrot.lane.b32.xlu0 %v177, 64
  %v180 = vpop.permute.xlu0 %179
  %v182 = vmul.f32 %v164, %v180
  %184 = vrot.lane.b32.xlu0 %v182, 32
  %v185 = vpop.permute.xlu0 %184
  %vm187 = vcmask 254976
  %188 = vst.msk [vmem:[#allocation2] sm:$0x3] %vm187, %v185
  %v189 = vpack.c.bf16 %v182, %v182
  %191 = vrot.lane.b32.xlu0 %v189, 32
  %v192 = vpop.permute.xlu0 %191
  %v194 = vsel %vm54, %v192, 0
  %196 = vmatprep.subr.bf16.mxu0 0
  %197 = vmatpush1.bf16.msra.mxu0 %v111
  %198 = vmatprep.subr.bf16.mxu0 0
  %199 = vmatpush1.bf16.msra.mxu0 %v112
  %200 = vmatprep.subr.bf16.mxu0 0
  %201 = vmatpush1.bf16.msra.mxu0 0
  %202 = vmatprep.subr.bf16.mxu0 0
  %203 = vmatpush1.bf16.msra.mxu0 0
  %204 = vmatprep.subr.bf16.mxu0 0
  %205 = vmatpush1.bf16.msra.mxu0 0
  %206 = vmatprep.subr.bf16.mxu0 0
  %207 = vmatpush1.bf16.msra.mxu0 0
  %208 = vmatprep.subr.bf16.mxu0 0
  %209 = vmatpush1.bf16.msra.mxu0 0
  %210 = vmatprep.subr.bf16.mxu0 0
  %211 = vmatpush1.bf16.msra.mxu0 0
  %212 = vmatprep.subr.bf16.mxu0 0
  %213 = vmatpush1.bf16.msra.mxu0 0
  %214 = vmatprep.subr.bf16.mxu0 0
  %215 = vmatpush1.bf16.msra.mxu0 0
  %216 = vmatprep.subr.bf16.mxu0 0
  %217 = vmatpush1.bf16.msra.mxu0 0
  %218 = vmatprep.subr.bf16.mxu0 0
  %219 = vmatpush1.bf16.msra.mxu0 0
  %220 = vmatprep.subr.bf16.mxu0 0
  %221 = vmatpush1.bf16.msra.mxu0 0
  %222 = vmatprep.subr.bf16.mxu0 0
  %223 = vmatpush1.bf16.msra.mxu0 0
  %224 = vmatprep.subr.bf16.mxu0 0
  %225 = vmatpush1.bf16.msra.mxu0 0
  %226 = vmatprep.subr.bf16.mxu0 0
  %227 = vmatpush1.bf16.msra.mxu0 0
  %228 = vmatprep.mubr.bf16.mxu0 0
  %229 = vmatmul.mubr.bf16.gmra.mrb[0].mxu0 %v194
  %v230 = vpop.f32.mrb[0].mxu0
  %v231 = vadd.f32 0.0, %v230
  %v232 = vpop.f32.mrb[0].mxu0
  %v233 = vpop.f32.mrb[0].mxu0
  %v234 = vpop.f32.mrb[0].mxu0
  %235 = vdwg.mxu0
  %v237 = vrot.slane %v231, 6
  %v239 = vadd.f32 %v93, %v237
  %v240 = vxor.u32 %v239, 2147483648
  %v241 = vmul.f32 %v240, 1.442695
  %v242 = vpow.pop %v241
  %v243 = vadd.f32 %v242, 1.0
  %v244 = vrcp.pop %v243
  %v245 = vmul.f32 1.0, %v244
  %v246 = vtanh.pop %v239
  %v248 = vrot.slane %v176, 6
  %v250 = vmul.f32 %v245, %v248
  %252 = vrot.lane.b32.xlu0 %v246, 64
  %v253 = vpop.permute.xlu0 %252
  %v255 = vmul.f32 %v245, %v253
  %257 = vrot.lane.b32.xlu0 %v255, 32
  %v258 = vpop.permute.xlu0 %257
  %v260 = vadd.f32 %v250, %v258
  %v261 = vtanh.pop %v260
  %263 = vrot.lane.b32.xlu0 %v261, 64
  %v264 = vpop.permute.xlu0 %263
  %v266 = vmul.f32 %v245, %v264
  %268 = vrot.lane.b32.xlu0 %v266, 32
  %v269 = vpop.permute.xlu0 %268
  %vm271 = vcmask 257026
  %272 = vst.msk [vmem:[#allocation2] sm:$0xc] %vm271, %v269
  %v273 = vpack.c.bf16 %v266, %v266
  %v275 = vrot.slane %v273, 1
  %276 = vrot.lane.b32.xlu0 %v275, 32
  %v277 = vpop.permute.xlu0 %276
  %v279 = vsel %vm54, %v277, 0
  %281 = vmatprep.subr.bf16.mxu0 0
  %282 = vmatpush1.bf16.msra.mxu0 %v111
  %283 = vmatprep.subr.bf16.mxu0 0
  %284 = vmatpush1.bf16.msra.mxu0 %v112
  %285 = vmatprep.subr.bf16.mxu0 0
  %286 = vmatpush1.bf16.msra.mxu0 0
  %287 = vmatprep.subr.bf16.mxu0 0
  %288 = vmatpush1.bf16.msra.mxu0 0
  %289 = vmatprep.subr.bf16.mxu0 0
  %290 = vmatpush1.bf16.msra.mxu0 0
  %291 = vmatprep.subr.bf16.mxu0 0
  %292 = vmatpush1.bf16.msra.mxu0 0
  %293 = vmatprep.subr.bf16.mxu0 0
  %294 = vmatpush1.bf16.msra.mxu0 0
  %295 = vmatprep.subr.bf16.mxu0 0
  %296 = vmatpush1.bf16.msra.mxu0 0
  %297 = vmatprep.subr.bf16.mxu0 0
  %298 = vmatpush1.bf16.msra.mxu0 0
  %299 = vmatprep.subr.bf16.mxu0 0
  %300 = vmatpush1.bf16.msra.mxu0 0
  %301 = vmatprep.subr.bf16.mxu0 0
  %302 = vmatpush1.bf16.msra.mxu0 0
  %303 = vmatprep.subr.bf16.mxu0 0
  %304 = vmatpush1.bf16.msra.mxu0 0
  %305 = vmatprep.subr.bf16.mxu0 0
  %306 = vmatpush1.bf16.msra.mxu0 0
  %307 = vmatprep.subr.bf16.mxu0 0
  %308 = vmatpush1.bf16.msra.mxu0 0
  %309 = vmatprep.subr.bf16.mxu0 0
  %310 = vmatpush1.bf16.msra.mxu0 0
  %311 = vmatprep.subr.bf16.mxu0 0
  %312 = vmatpush1.bf16.msra.mxu0 0
  %313 = vmatprep.mubr.bf16.mxu0 0
  %314 = vmatmul.mubr.bf16.gmra.mrb[0].mxu0 %v279
  %v315 = vpop.f32.mrb[0].mxu0
  %v316 = vadd.f32 0.0, %v315
  %v317 = vpop.f32.mrb[0].mxu0
  %v318 = vpop.f32.mrb[0].mxu0
  %v319 = vpop.f32.mrb[0].mxu0
  %320 = vdwg.mxu0
  %v322 = vrot.slane %v316, 4
  %v324 = vadd.f32 %v93, %v322
  %v325 = vxor.u32 %v324, 2147483648
  %v326 = vmul.f32 %v325, 1.442695
  %v327 = vpow.pop %v326
  %v328 = vadd.f32 %v327, 1.0
  %v329 = vrcp.pop %v328
  %v330 = vmul.f32 1.0, %v329
  %v331 = vtanh.pop %v324
  %v333 = vrot.slane %v260, 6
  %v335 = vmul.f32 %v330, %v333
  %337 = vrot.lane.b32.xlu0 %v331, 64
  %v338 = vpop.permute.xlu0 %337
  %v340 = vmul.f32 %v330, %v338
  %342 = vrot.lane.b32.xlu0 %v340, 32
  %v343 = vpop.permute.xlu0 %342
  %v345 = vadd.f32 %v335, %v343
  %v346 = vtanh.pop %v345
  %348 = vrot.lane.b32.xlu0 %v346, 64
  %v349 = vpop.permute.xlu0 %348
  %v351 = vmul.f32 %v330, %v349
  %353 = vrot.lane.b32.xlu0 %v351, 32
  %v354 = vpop.permute.xlu0 %353
  %vm356 = vcmask 259076
  %357 = vst.msk [vmem:[#allocation2] sm:$0x30] %vm356, %v354
  %v358 = vpack.c.bf16 %v351, %v351
  %v360 = vrot.slane %v358, 2
  %361 = vrot.lane.b32.xlu0 %v360, 32
  %v362 = vpop.permute.xlu0 %361
  %v364 = vsel %vm54, %v362, 0
  %366 = vmatprep.subr.bf16.mxu0 0
  %367 = vmatpush1.bf16.msra.mxu0 %v111
  %368 = vmatprep.subr.bf16.mxu0 0
  %369 = vmatpush1.bf16.msra.mxu0 %v112
  %370 = vmatprep.subr.bf16.mxu0 0
  %371 = vmatpush1.bf16.msra.mxu0 0
  %372 = vmatprep.subr.bf16.mxu0 0
  %373 = vmatpush1.bf16.msra.mxu0 0
  %374 = vmatprep.subr.bf16.mxu0 0
  %375 = vmatpush1.bf16.msra.mxu0 0
  %376 = vmatprep.subr.bf16.mxu0 0
  %377 = vmatpush1.bf16.msra.mxu0 0
  %378 = vmatprep.subr.bf16.mxu0 0
  %379 = vmatpush1.bf16.msra.mxu0 0
  %380 = vmatprep.subr.bf16.mxu0 0
  %381 = vmatpush1.bf16.msra.mxu0 0
  %382 = vmatprep.subr.bf16.mxu0 0
  %383 = vmatpush1.bf16.msra.mxu0 0
  %384 = vmatprep.subr.bf16.mxu0 0
  %385 = vmatpush1.bf16.msra.mxu0 0
  %386 = vmatprep.subr.bf16.mxu0 0
  %387 = vmatpush1.bf16.msra.mxu0 0
  %388 = vmatprep.subr.bf16.mxu0 0
  %389 = vmatpush1.bf16.msra.mxu0 0
  %390 = vmatprep.subr.bf16.mxu0 0
  %391 = vmatpush1.bf16.msra.mxu0 0
  %392 = vmatprep.subr.bf16.mxu0 0
  %393 = vmatpush1.bf16.msra.mxu0 0
  %394 = vmatprep.subr.bf16.mxu0 0
  %395 = vmatpush1.bf16.msra.mxu0 0
  %396 = vmatprep.subr.bf16.mxu0 0
  %397 = vmatpush1.bf16.msra.mxu0 0
  %398 = vmatprep.mubr.bf16.mxu0 0
  %399 = vmatmul.mubr.bf16.gmra.mrb[0].mxu0 %v364
  %v400 = vpop.f32.mrb[0].mxu0
  %v401 = vadd.f32 0.0, %v400
  %v402 = vpop.f32.mrb[0].mxu0
  %v403 = vpop.f32.mrb[0].mxu0
  %v404 = vpop.f32.mrb[0].mxu0
  %405 = vdwg.mxu0
  %v407 = vrot.slane %v401, 2
  %v409 = vadd.f32 %v93, %v407
  %v410 = vxor.u32 %v409, 2147483648
  %v411 = vmul.f32 %v410, 1.442695
  %v412 = vpow.pop %v411
  %v413 = vadd.f32 %v412, 1.0
  %v414 = vrcp.pop %v413
  %v415 = vmul.f32 1.0, %v414
  %v416 = vtanh.pop %v409
  %v418 = vrot.slane %v345, 6
  %v420 = vmul.f32 %v415, %v418
  %422 = vrot.lane.b32.xlu0 %v416, 64
  %v423 = vpop.permute.xlu0 %422
  %v425 = vmul.f32 %v415, %v423
  %427 = vrot.lane.b32.xlu0 %v425, 32
  %v428 = vpop.permute.xlu0 %427
  %v430 = vadd.f32 %v420, %v428
  %v431 = vtanh.pop %v430
  %433 = vrot.lane.b32.xlu0 %v431, 64
  %v434 = vpop.permute.xlu0 %433
  %v436 = vmul.f32 %v415, %v434
  %438 = vrot.lane.b32.xlu0 %v436, 32
  %v439 = vpop.permute.xlu0 %438
  %vm441 = vcmask 261126
  %442 = vst.msk [vmem:[#allocation2] sm:$0xc0] %vm441, %v439
  %v443 = vpack.c.bf16 %v436, %v436
  %v445 = vrot.slane %v443, 3
  %446 = vrot.lane.b32.xlu0 %v445, 32
  %v447 = vpop.permute.xlu0 %446
  %v449 = vsel %vm54, %v447, 0
  %451 = vmatprep.subr.bf16.mxu0 0
  %452 = vmatpush1.bf16.msra.mxu0 %v111
  %453 = vmatprep.subr.bf16.mxu0 0
  %454 = vmatpush1.bf16.msra.mxu0 %v112
  %455 = vmatprep.subr.bf16.mxu0 0
  %456 = vmatpush1.bf16.msra.mxu0 0
  %457 = vmatprep.subr.bf16.mxu0 0
  %458 = vmatpush1.bf16.msra.mxu0 0
  %459 = vmatprep.subr.bf16.mxu0 0
  %460 = vmatpush1.bf16.msra.mxu0 0
  %461 = vmatprep.subr.bf16.mxu0 0
  %462 = vmatpush1.bf16.msra.mxu0 0
  %463 = vmatprep.subr.bf16.mxu0 0
  %464 = vmatpush1.bf16.msra.mxu0 0
  %465 = vmatprep.subr.bf16.mxu0 0
  %466 = vmatpush1.bf16.msra.mxu0 0
  %467 = vmatprep.subr.bf16.mxu0 0
  %468 = vmatpush1.bf16.msra.mxu0 0
  %469 = vmatprep.subr.bf16.mxu0 0
  %470 = vmatpush1.bf16.msra.mxu0 0
  %471 = vmatprep.subr.bf16.mxu0 0
  %472 = vmatpush1.bf16.msra.mxu0 0
  %473 = vmatprep.subr.bf16.mxu0 0
  %474 = vmatpush1.bf16.msra.mxu0 0
  %475 = vmatprep.subr.bf16.mxu0 0
  %476 = vmatpush1.bf16.msra.mxu0 0
  %477 = vmatprep.subr.bf16.mxu0 0
  %478 = vmatpush1.bf16.msra.mxu0 0
  %479 = vmatprep.subr.bf16.mxu0 0
  %480 = vmatpush1.bf16.msra.mxu0 0
  %481 = vmatprep.subr.bf16.mxu0 0
  %482 = vmatpush1.bf16.msra.mxu0 0
  %483 = vmatprep.mubr.bf16.mxu0 0
  %484 = vmatmul.mubr.bf16.gmra.mrb[0].mxu0 %v449
  %v485 = vpop.f32.mrb[0].mxu0
  %v486 = vadd.f32 0.0, %v485
  %v487 = vpop.f32.mrb[0].mxu0
  %v488 = vpop.f32.mrb[0].mxu0
  %v489 = vpop.f32.mrb[0].mxu0
  %490 = vdwg.mxu0
  %v491 = vadd.f32 %v96, %v486
  %v492 = vxor.u32 %v491, 2147483648
  %v493 = vmul.f32 %v492, 1.442695
  %v494 = vpow.pop %v493
  %v495 = vadd.f32 %v494, 1.0
  %v496 = vrcp.pop %v495
  %v497 = vmul.f32 1.0, %v496
  %v498 = vtanh.pop %v491
  %v500 = vrot.slane %v430, 6
  %v502 = vmul.f32 %v497, %v500
  %504 = vrot.lane.b32.xlu0 %v498, 64
  %v505 = vpop.permute.xlu0 %504
  %v507 = vmul.f32 %v497, %v505
  %509 = vrot.lane.b32.xlu0 %v507, 32
  %v510 = vpop.permute.xlu0 %509
  %v512 = vadd.f32 %v502, %v510
  %v513 = vtanh.pop %v512
  %515 = vrot.lane.b32.xlu0 %v513, 64
  %v516 = vpop.permute.xlu0 %515
  %v518 = vmul.f32 %v497, %v516
  %520 = vrot.lane.b32.xlu0 %v518, 32
  %v521 = vpop.permute.xlu0 %520
  %523 = vst.msk [vmem:[#allocation2 + $0x8] sm:$0x3] %vm187, %v521
  %v524 = vpack.c.bf16 %v518, %v518
  %526 = vrot.lane.b32.xlu0 %v524, 32
  %v527 = vpop.permute.xlu0 %526
  %v529 = vsel %vm54, %v527, 0
  %531 = vmatprep.subr.bf16.mxu0 0
  %532 = vmatpush1.bf16.msra.mxu0 %v111
  %533 = vmatprep.subr.bf16.mxu0 0
  %534 = vmatpush1.bf16.msra.mxu0 %v112
  %535 = vmatprep.subr.bf16.mxu0 0
  %536 = vmatpush1.bf16.msra.mxu0 0
  %537 = vmatprep.subr.bf16.mxu0 0
  %538 = vmatpush1.bf16.msra.mxu0 0
  %539 = vmatprep.subr.bf16.mxu0 0
  %540 = vmatpush1.bf16.msra.mxu0 0
  %541 = vmatprep.subr.bf16.mxu0 0
  %542 = vmatpush1.bf16.msra.mxu0 0
  %543 = vmatprep.subr.bf16.mxu0 0
  %544 = vmatpush1.bf16.msra.mxu0 0
  %545 = vmatprep.subr.bf16.mxu0 0
  %546 = vmatpush1.bf16.msra.mxu0 0
  %547 = vmatprep.subr.bf16.mxu0 0
  %548 = vmatpush1.bf16.msra.mxu0 0
  %549 = vmatprep.subr.bf16.mxu0 0
  %550 = vmatpush1.bf16.msra.mxu0 0
  %551 = vmatprep.subr.bf16.mxu0 0
  %552 = vmatpush1.bf16.msra.mxu0 0
  %553 = vmatprep.subr.bf16.mxu0 0
  %554 = vmatpush1.bf16.msra.mxu0 0
  %555 = vmatprep.subr.bf16.mxu0 0
  %556 = vmatpush1.bf16.msra.mxu0 0
  %557 = vmatprep.subr.bf16.mxu0 0
  %558 = vmatpush1.bf16.msra.mxu0 0
  %559 = vmatprep.subr.bf16.mxu0 0
  %560 = vmatpush1.bf16.msra.mxu0 0
  %561 = vmatprep.subr.bf16.mxu0 0
  %562 = vmatpush1.bf16.msra.mxu0 0
  %563 = vmatprep.mubr.bf16.mxu0 0
  %564 = vmatmul.mubr.bf16.gmra.mrb[0].mxu0 %v529
  %v565 = vpop.f32.mrb[0].mxu0
  %v566 = vadd.f32 0.0, %v565
  %v567 = vpop.f32.mrb[0].mxu0
  %v568 = vpop.f32.mrb[0].mxu0
  %v569 = vpop.f32.mrb[0].mxu0
  %570 = vdwg.mxu0
  %v572 = vrot.slane %v566, 6
  %v574 = vadd.f32 %v96, %v572
  %v575 = vxor.u32 %v574, 2147483648
  %v576 = vmul.f32 %v575, 1.442695
  %v577 = vpow.pop %v576
  %v578 = vadd.f32 %v577, 1.0
  %v579 = vrcp.pop %v578
  %v580 = vmul.f32 1.0, %v579
  %v581 = vtanh.pop %v574
  %v583 = vrot.slane %v512, 6
  %v585 = vmul.f32 %v580, %v583
  %587 = vrot.lane.b32.xlu0 %v581, 64
  %v588 = vpop.permute.xlu0 %587
  %v590 = vmul.f32 %v580, %v588
  %592 = vrot.lane.b32.xlu0 %v590, 32
  %v593 = vpop.permute.xlu0 %592
  %v595 = vadd.f32 %v585, %v593
  %v596 = vtanh.pop %v595
  %598 = vrot.lane.b32.xlu0 %v596, 64
  %v599 = vpop.permute.xlu0 %598
  %v601 = vmul.f32 %v580, %v599
  %603 = vrot.lane.b32.xlu0 %v601, 32
  %v604 = vpop.permute.xlu0 %603
  %606 = vst.msk [vmem:[#allocation2 + $0x8] sm:$0xc] %vm271, %v604
  %v607 = vpack.c.bf16 %v601, %v601
  %v609 = vrot.slane %v607, 1
  %610 = vrot.lane.b32.xlu0 %v609, 32
  %v611 = vpop.permute.xlu0 %610
  %v613 = vsel %vm54, %v611, 0
  %615 = vmatprep.subr.bf16.mxu0 0
  %616 = vmatpush1.bf16.msra.mxu0 %v111
  %617 = vmatprep.subr.bf16.mxu0 0
  %618 = vmatpush1.bf16.msra.mxu0 %v112
  %619 = vmatprep.subr.bf16.mxu0 0
  %620 = vmatpush1.bf16.msra.mxu0 0
  %621 = vmatprep.subr.bf16.mxu0 0
  %622 = vmatpush1.bf16.msra.mxu0 0
  %623 = vmatprep.subr.bf16.mxu0 0
  %624 = vmatpush1.bf16.msra.mxu0 0
  %625 = vmatprep.subr.bf16.mxu0 0
  %626 = vmatpush1.bf16.msra.mxu0 0
  %627 = vmatprep.subr.bf16.mxu0 0
  %628 = vmatpush1.bf16.msra.mxu0 0
  %629 = vmatprep.subr.bf16.mxu0 0
  %630 = vmatpush1.bf16.msra.mxu0 0
  %631 = vmatprep.subr.bf16.mxu0 0
  %632 = vmatpush1.bf16.msra.mxu0 0
  %633 = vmatprep.subr.bf16.mxu0 0
  %634 = vmatpush1.bf16.msra.mxu0 0
  %635 = vmatprep.subr.bf16.mxu0 0
  %636 = vmatpush1.bf16.msra.mxu0 0
  %637 = vmatprep.subr.bf16.mxu0 0
  %638 = vmatpush1.bf16.msra.mxu0 0
  %639 = vmatprep.subr.bf16.mxu0 0
  %640 = vmatpush1.bf16.msra.mxu0 0
  %641 = vmatprep.subr.bf16.mxu0 0
  %642 = vmatpush1.bf16.msra.mxu0 0
  %643 = vmatprep.subr.bf16.mxu0 0
  %644 = vmatpush1.bf16.msra.mxu0 0
  %645 = vmatprep.subr.bf16.mxu0 0
  %646 = vmatpush1.bf16.msra.mxu0 0
  %647 = vmatprep.mubr.bf16.mxu0 0
  %648 = vmatmul.mubr.bf16.gmra.mrb[0].mxu0 %v613
  %v649 = vpop.f32.mrb[0].mxu0
  %v650 = vadd.f32 0.0, %v649
  %v651 = vpop.f32.mrb[0].mxu0
  %v652 = vpop.f32.mrb[0].mxu0
  %v653 = vpop.f32.mrb[0].mxu0
  %654 = vdwg.mxu0
  %v656 = vrot.slane %v650, 4
  %v658 = vadd.f32 %v96, %v656
  %v659 = vxor.u32 %v658, 2147483648
  %v660 = vmul.f32 %v659, 1.442695
  %v661 = vpow.pop %v660
  %v662 = vadd.f32 %v661, 1.0
  %v663 = vrcp.pop %v662
  %v664 = vmul.f32 1.0, %v663
  %v665 = vtanh.pop %v658
  %v667 = vrot.slane %v595, 6
  %v669 = vmul.f32 %v664, %v667
  %671 = vrot.lane.b32.xlu0 %v665, 64
  %v672 = vpop.permute.xlu0 %671
  %v674 = vmul.f32 %v664, %v672
  %676 = vrot.lane.b32.xlu0 %v674, 32
  %v677 = vpop.permute.xlu0 %676
  %v679 = vadd.f32 %v669, %v677
  %v680 = vtanh.pop %v679
  %682 = vrot.lane.b32.xlu0 %v680, 64
  %v683 = vpop.permute.xlu0 %682
  %v685 = vmul.f32 %v664, %v683
  %687 = vrot.lane.b32.xlu0 %v685, 32
  %v688 = vpop.permute.xlu0 %687
  %690 = vst.msk [vmem:[#allocation2 + $0x8] sm:$0x30] %vm356, %v688
  %v691 = vpack.c.bf16 %v685, %v685
  %v693 = vrot.slane %v691, 2
  %694 = vrot.lane.b32.xlu0 %v693, 32
  %v695 = vpop.permute.xlu0 %694
  %v697 = vsel %vm54, %v695, 0
  %699 = vmatprep.subr.bf16.mxu0 0
  %700 = vmatpush1.bf16.msra.mxu0 %v111
  %701 = vmatprep.subr.bf16.mxu0 0
  %702 = vmatpush1.bf16.msra.mxu0 %v112
  %703 = vmatprep.subr.bf16.mxu0 0
  %704 = vmatpush1.bf16.msra.mxu0 0
  %705 = vmatprep.subr.bf16.mxu0 0
  %706 = vmatpush1.bf16.msra.mxu0 0
  %707 = vmatprep.subr.bf16.mxu0 0
  %708 = vmatpush1.bf16.msra.mxu0 0
  %709 = vmatprep.subr.bf16.mxu0 0
  %710 = vmatpush1.bf16.msra.mxu0 0
  %711 = vmatprep.subr.bf16.mxu0 0
  %712 = vmatpush1.bf16.msra.mxu0 0
  %713 = vmatprep.subr.bf16.mxu0 0
  %714 = vmatpush1.bf16.msra.mxu0 0
  %715 = vmatprep.subr.bf16.mxu0 0
  %716 = vmatpush1.bf16.msra.mxu0 0
  %717 = vmatprep.subr.bf16.mxu0 0
  %718 = vmatpush1.bf16.msra.mxu0 0
  %719 = vmatprep.subr.bf16.mxu0 0
  %720 = vmatpush1.bf16.msra.mxu0 0
  %721 = vmatprep.subr.bf16.mxu0 0
  %722 = vmatpush1.bf16.msra.mxu0 0
  %723 = vmatprep.subr.bf16.mxu0 0
  %724 = vmatpush1.bf16.msra.mxu0 0
  %725 = vmatprep.subr.bf16.mxu0 0
  %726 = vmatpush1.bf16.msra.mxu0 0
  %727 = vmatprep.subr.bf16.mxu0 0
  %728 = vmatpush1.bf16.msra.mxu0 0
  %729 = vmatprep.subr.bf16.mxu0 0
  %730 = vmatpush1.bf16.msra.mxu0 0
  %731 = vmatprep.mubr.bf16.mxu0 0
  %732 = vmatmul.mubr.bf16.gmra.mrb[0].mxu0 %v697
  %v733 = vpop.f32.mrb[0].mxu0
  %v734 = vadd.f32 0.0, %v733
  %v735 = vpop.f32.mrb[0].mxu0
  %v736 = vpop.f32.mrb[0].mxu0
  %v737 = vpop.f32.mrb[0].mxu0
  %738 = vdwg.mxu0
  %v740 = vrot.slane %v734, 2
  %v742 = vadd.f32 %v96, %v740
  %v743 = vxor.u32 %v742, 2147483648
  %v744 = vmul.f32 %v743, 1.442695
  %v745 = vpow.pop %v744
  %v746 = vadd.f32 %v745, 1.0
  %v747 = vrcp.pop %v746
  %v748 = vmul.f32 1.0, %v747
  %v749 = vtanh.pop %v742
  %v751 = vrot.slane %v679, 6
  %v753 = vmul.f32 %v748, %v751
  %755 = vrot.lane.b32.xlu0 %v749, 64
  %v756 = vpop.permute.xlu0 %755
  %v758 = vmul.f32 %v748, %v756
  %760 = vrot.lane.b32.xlu0 %v758, 32
  %v761 = vpop.permute.xlu0 %760
  %v763 = vadd.f32 %v753, %v761
  %v764 = vtanh.pop %v763
  %766 = vrot.lane.b32.xlu0 %v764, 64
  %v767 = vpop.permute.xlu0 %766
  %v769 = vmul.f32 %v748, %v767
  %771 = vrot.lane.b32.xlu0 %v769, 32
  %v772 = vpop.permute.xlu0 %771
  %774 = vst.msk [vmem:[#allocation2 + $0x8] sm:$0xc0] %vm441, %v772
  %v775 = vld [vmem:[#allocation2] sm:$0xff]
  %v776 = vld [vmem:[#allocation2 + $0x8] sm:$0xff]
  %v777 = vpack.c.bf16 %v776, %v775
  %v778 = vld [vmem:[%s4] sm:$0xf]
  %v779 = vld [vmem:[%s4 + $0x4] sm:$0xf]
  %v780 = vld [vmem:[%s4 + $0x8] sm:$0xf]
  %v781 = vld [vmem:[%s4 + $0xc] sm:$0xf]
  %v782 = vld [vmem:[%s5] sm:$0x1]
  %v784 = vlaneseq
  %v785 = vshrl.u32 %v784, 7
  %v786 = vsub.s32 0, %v785
  %v787 = vrot.slane %v782, %v786
  %v793 = vunpack.c.l.b16 %v778
  %v794 = vunpack.c.l.b16 %v779
  %v795 = vunpack.c.l.b16 %v780
  %v796 = vunpack.c.l.b16 %v781
  %v797 = vpack.c.b16 %v794, %v793
  %v798 = vpack.c.b16 %v796, %v795
  %v802 = vsel %vm54, %v777, 0
  %804 = vmatprep.subr.bf16.mxu0 0
  %805 = vmatpush1.bf16.msra.mxu0 %v797
  %806 = vmatprep.subr.bf16.mxu0 0
  %807 = vmatpush1.bf16.msra.mxu0 %v798
  %808 = vmatprep.subr.bf16.mxu0 0
  %809 = vmatpush1.bf16.msra.mxu0 0
  %810 = vmatprep.subr.bf16.mxu0 0
  %811 = vmatpush1.bf16.msra.mxu0 0
  %812 = vmatprep.subr.bf16.mxu0 0
  %813 = vmatpush1.bf16.msra.mxu0 0
  %814 = vmatprep.subr.bf16.mxu0 0
  %815 = vmatpush1.bf16.msra.mxu0 0
  %816 = vmatprep.subr.bf16.mxu0 0
  %817 = vmatpush1.bf16.msra.mxu0 0
  %818 = vmatprep.subr.bf16.mxu0 0
  %819 = vmatpush1.bf16.msra.mxu0 0
  %820 = vmatprep.subr.bf16.mxu0 0
  %821 = vmatpush1.bf16.msra.mxu0 0
  %822 = vmatprep.subr.bf16.mxu0 0
  %823 = vmatpush1.bf16.msra.mxu0 0
  %824 = vmatprep.subr.bf16.mxu0 0
  %825 = vmatpush1.bf16.msra.mxu0 0
  %826 = vmatprep.subr.bf16.mxu0 0
  %827 = vmatpush1.bf16.msra.mxu0 0
  %828 = vmatprep.subr.bf16.mxu0 0
  %829 = vmatpush1.bf16.msra.mxu0 0
  %830 = vmatprep.subr.bf16.mxu0 0
  %831 = vmatpush1.bf16.msra.mxu0 0
  %832 = vmatprep.subr.bf16.mxu0 0
  %833 = vmatpush1.bf16.msra.mxu0 0
  %834 = vmatprep.subr.bf16.mxu0 0
  %835 = vmatpush1.bf16.msra.mxu0 0
  %836 = vmatprep.mubr.bf16.mxu0 0
  %837 = vmatmul.mubr.bf16.gmra.mrb[0].mxu0 %v802
  %v838 = vpop.f32.mrb[0].mxu0
  %v839 = vadd.f32 %v787, %v838
  %v840 = vpop.f32.mrb[0].mxu0
  %v841 = vpop.f32.mrb[0].mxu0
  %v842 = vadd.f32 %v787, %v841
  %v843 = vpop.f32.mrb[0].mxu0
  %844 = vdwg.mxu0
  %845 = vst [vmem:[%s6] sm:$0xff] %v839
  %846 = vst [vmem:[%s6 + $0x8] sm:$0xff] %v842
  // Predicated region
  $region26: #{pos_predictor_forward.3} parent=0 // pred_check
    _
  $region27: #{pos_predictor_forward.3} parent=0 // pred_check_branch
    %848 = sbr.rel (0) target = $region29
  $region28: #{pos_predictor_forward.3} parent=0 // pred_region
    _
  $region29: #{pos_predictor_forward.3} parent=0 // pred_fallthru
    _
  // Predicated region
  $region30: #{pos_predictor_forward.3} parent=0 // pred_check
    _
  $region31: #{pos_predictor_forward.3} parent=0 // pred_check_branch
    %850 = sbr.rel (0) target = $region33
  $region32: #{pos_predictor_forward.3} parent=0 // pred_region
    _
  $region33: #{pos_predictor_forward.3} parent=0 // pred_fallthru
    _

</llo_original>
